<compile_context>
chip_gen: v7x
topology: tpu7x:2x2x1
jax: 0.10.0
libtpu: 0.0.40
codegen_flags: <defaults>
</compile_context>

<pallas_src>
import functools

import jax
import jax.numpy as jnp
from jax import lax
from jax.experimental import pallas as pl
from jax.experimental.pallas import tpu as pltpu

CHN_MID = 32
EPS = 0.1
LEAKY_SLOPE = 0.2
LANE = 128
FEAT_ROWS = 8  # 4 real features + 4 zero rows (sublane-aligned conv1 operand)


def _leaky_relu(x):
    # Exact LeakyReLU(0.2) for slope in (0,1); 2 VPU ops instead of 3.
    return jnp.maximum(x, LEAKY_SLOPE * x)


def _dist2logit_kernel(d0_ref, d1_ref,
                       w1t_ref, b1_ref, w2t_ref, b2_ref, w3c_ref, b3_ref,
                       o_ref, feats_ref):
    # Lane-dense tiles: pixels on lanes, channels on sublanes.
    d0 = d0_ref[...]                                   # (1, TL)
    d1 = d1_ref[...]                                   # (1, TL)

    # Build the 4-row feature block directly in an 8-sublane VMEM scratch.
    # (d0 - d1) has been folded into the conv1 weights in the wrapper.
    # Divides use EUP reciprocals (separate VLIW slot from the VPU).
    feats_ref[0:1, :] = d0
    feats_ref[1:2, :] = d1
    feats_ref[2:3, :] = d0 * pl.reciprocal(d1 + EPS, approx=False)
    feats_ref[3:4, :] = d1 * pl.reciprocal(d0 + EPS, approx=False)
    # Zero the padding rows every step: scratch is uninitialized and per-core,
    # and NaN-garbage * 0-weight would still poison the MXU accumulation.
    feats_ref[4:8, :] = jnp.zeros((4, feats_ref.shape[1]), jnp.float32)

    # conv1 (1x1) on the MXU: (32, 8) @ (8, TL) -> (32, TL)
    h = jnp.dot(w1t_ref[...], feats_ref[...],
                preferred_element_type=jnp.float32,
                precision=lax.Precision.HIGHEST) + b1_ref[...]
    h = _leaky_relu(h)

    # conv2 (1x1) on the MXU: (32, 32) @ (32, TL) -> (32, TL)
    h = jnp.dot(w2t_ref[...], h,
                preferred_element_type=jnp.float32,
                precision=lax.Precision.HIGHEST) + b2_ref[...]
    h = _leaky_relu(h)

    # conv3 (1x1) OFF the MXU: VPU multiply by the broadcast w3 column and a
    # sublane reduction over the 32-channel axis; bias is an SMEM scalar.
    logit = jnp.sum(h * w3c_ref[...], axis=0, keepdims=True) + b3_ref[0, 0]
    o_ref[...] = jax.nn.sigmoid(logit)                 # (1, TL), lane-dense store


def _round_up(x, m):
    return (x + m - 1) // m * m


@functools.partial(jax.jit, static_argnames=("tl",))
def dist2logit(d0, d1, params, *, tl=32768):
    """d0, d1: (N, 1, H, W) float32 -> (N, 1, H, W) float32 in [0, 1]."""
    assert tl % LANE == 0
    w1, b1, w2, b2, w3, b3 = params
    N, C, H, W = d0.shape
    assert C == 1
    M = N * H * W

    # Lane-align the pixel axis; pick the tile.
    Mp = _round_up(M, LANE)
    tile = min(tl, Mp)
    # Ensure >=2 grid steps when possible so v7x can shard across both TCs.
    if Mp > LANE and Mp // tile < 2:
        tile = _round_up(pl.cdiv(Mp, 2), LANE)
    Mp = _round_up(Mp, tile)

    def flat(x):
        x = x.reshape(1, M).astype(jnp.float32)
        if Mp > M:  # pad only when needed (zero pad keeps the reciprocals finite)
            x = jnp.pad(x, ((0, 0), (0, Mp - M)))
        return x

    d0f, d1f = flat(d0), flat(d1)

    # Fold the (d0 - d1) feature into the conv1 weights:
    #   feature order was [d0, d1, d0-d1, d0/(d1+eps), d1/(d0+eps)].
    w1f = w1.astype(jnp.float32)                       # (5, 32)
    w1fold = jnp.stack([w1f[0] + w1f[2],               # d0 coefficient
                        w1f[1] - w1f[2],               # d1 coefficient
                        w1f[3],
                        w1f[4]], axis=0)               # (4, 32)
    w1pad = jnp.concatenate(
        [w1fold, jnp.zeros((FEAT_ROWS - 4, CHN_MID), jnp.float32)], axis=0)  # (8,32)

    # Pre-transpose so each 1x1 conv is (out, in) @ (in, pixels).
    w1t = jnp.transpose(w1pad)                          # (32, 8)
    w2t = jnp.transpose(w2).astype(jnp.float32)         # (32, 32)
    w3c = w3.reshape(CHN_MID, 1).astype(jnp.float32)    # (32, 1) broadcast column
    b1c = b1.reshape(CHN_MID, 1).astype(jnp.float32)    # broadcast across lanes
    b2c = b2.reshape(CHN_MID, 1).astype(jnp.float32)
    b3s = b3.reshape(1, 1).astype(jnp.float32)          # SMEM scalar

    grid = (Mp // tile,)
    full = lambda shape: pl.BlockSpec(shape, lambda i: (0, 0))   # fetched once
    row = pl.BlockSpec((1, tile), lambda i: (0, i))

    cost = pl.CostEstimate(
        flops=2 * M * (FEAT_ROWS * CHN_MID + CHN_MID * CHN_MID + CHN_MID) + 10 * M,
        transcendentals=4 * M,          # 2 reciprocals + sigmoid (exp + recip)
        bytes_accessed=3 * M * 4,       # 2 inputs + 1 output, f32
    )

    out = pl.pallas_call(
        _dist2logit_kernel,
        out_shape=jax.ShapeDtypeStruct((1, Mp), jnp.float32),
        grid_spec=pltpu.PrefetchScalarGridSpec(
            num_scalar_prefetch=0,
            grid=grid,
            in_specs=[
                row,                                   # d0 (1, tile)
                row,                                   # d1 (1, tile)
                full((CHN_MID, FEAT_ROWS)),            # w1^T (folded + padded)
                full((CHN_MID, 1)),                    # b1
                full((CHN_MID, CHN_MID)),              # w2^T
                full((CHN_MID, 1)),                    # b2
                full((CHN_MID, 1)),                    # w3 column (VPU conv3)
                pl.BlockSpec(memory_space=pltpu.MemorySpace.SMEM),  # b3 scalar
            ],
            out_specs=row,
            scratch_shapes=[pltpu.VMEM((FEAT_ROWS, tile), jnp.float32)],
        ),
        compiler_params=pltpu.CompilerParams(
            dimension_semantics=("parallel",),         # shards pixel loop on v7x
            vmem_limit_bytes=40 * 1024 * 1024,         # > v5e 16 MiB default, < v7x cap
        ),
        cost_estimate=cost,
    )(d0f, d1f, w1t, b1c, w2t, b2c, w3c, b3s)

    if Mp > M:
        out = out[:, :M]
    return out.reshape(N, 1, H, W)


def init_params(key, chn_mid=CHN_MID):
    """Deterministic synthetic weights with Conv2d-like shapes (1x1 kernels
    stored as dense (in, out) matrices)."""
    ks = jax.random.split(key, 6)
    scale1 = 1.0 / jnp.sqrt(5.0)
    scale2 = 1.0 / jnp.sqrt(float(chn_mid))
    w1 = jax.random.uniform(ks[0], (5, chn_mid), jnp.float32, -scale1, scale1)
    b1 = jax.random.uniform(ks[1], (1, chn_mid), jnp.float32, -scale1, scale1)
    w2 = jax.random.uniform(ks[2], (chn_mid, chn_mid), jnp.float32, -scale2, scale2)
    b2 = jax.random.uniform(ks[3], (1, chn_mid), jnp.float32, -scale2, scale2)
    w3 = jax.random.uniform(ks[4], (chn_mid, 1), jnp.float32, -scale2, scale2)
    b3 = jax.random.uniform(ks[5], (1, 1), jnp.float32, -scale2, scale2)
    return (w1, b1, w2, b2, w3, b3)


def dist2logit_ref(d0, d1, params):
    """Pure-JAX reference mirroring the PyTorch forward (NCHW)."""
    w1, b1, w2, b2, w3, b3 = params
    x = jnp.concatenate(
        [d0, d1, d0 - d1, d0 / (d1 + EPS), d1 / (d0 + EPS)], axis=1)  # (N,5,H,W)
    x = jnp.einsum('nchw,cd->ndhw', x, w1) + b1[0][None, :, None, None]
    x = jnp.where(x >= 0, x, LEAKY_SLOPE * x)
    x = jnp.einsum('nchw,cd->ndhw', x, w2) + b2[0][None, :, None, None]
    x = jnp.where(x >= 0, x, LEAKY_SLOPE * x)
    x = jnp.einsum('nchw,cd->ndhw', x, w3) + b3[0][None, :, None, None]
    return jax.nn.sigmoid(x)


if __name__ == "__main__":
    key = jax.random.PRNGKey(0)
    k_d0, k_d1, k_p = jax.random.split(key, 3)
    params = init_params(k_p)

    # Case 1: lane-aligned pixel count (also exercises the >=2 grid-step split).
    N, H, W = 2, 16, 16
    d0 = jax.random.uniform(k_d0, (N, 1, H, W), jnp.float32, 0.0, 2.0)
    d1 = jax.random.uniform(k_d1, (N, 1, H, W), jnp.float32, 0.0, 2.0)
    out = jax.block_until_ready(dist2logit(d0, d1, params))
    ref = dist2logit_ref(d0, d1, params)
    assert out.shape == (N, 1, H, W)
    assert jnp.allclose(out, ref, atol=1e-5, rtol=1e-5), float(
        jnp.max(jnp.abs(out - ref)))

    # Case 2: ragged pixel count (exercises the lane-padding path).
    N2, H2, W2 = 1, 5, 9
    d0b = jax.random.uniform(jax.random.PRNGKey(7), (N2, 1, H2, W2),
                             jnp.float32, 0.0, 2.0)
    d1b = jax.random.uniform(jax.random.PRNGKey(8), (N2, 1, H2, W2),
                             jnp.float32, 0.0, 2.0)
    out2 = jax.block_until_ready(dist2logit(d0b, d1b, params))
    ref2 = dist2logit_ref(d0b, d1b, params)
    assert out2.shape == (N2, 1, H2, W2)
    assert jnp.allclose(out2, ref2, atol=1e-5, rtol=1e-5), float(
        jnp.max(jnp.abs(out2 - ref2)))

    print("KERNEL_OK")
</pallas_src>

<mosaic_0001>
module attributes {stable_mosaic.version = 11 : i64} {
  func.func @_dist2logit_kernel(%arg0: i32, %arg1: memref<1x256xf32, #tpu.memory_space<vmem>>, %arg2: memref<1x256xf32, #tpu.memory_space<vmem>>, %arg3: memref<32x8xf32, #tpu.memory_space<vmem>>, %arg4: memref<32x1xf32, #tpu.memory_space<vmem>>, %arg5: memref<32x32xf32, #tpu.memory_space<vmem>>, %arg6: memref<32x1xf32, #tpu.memory_space<vmem>>, %arg7: memref<32x1xf32, #tpu.memory_space<vmem>>, %arg8: memref<1x1xf32, #tpu.memory_space<smem>>, %arg9: memref<1x256xf32, #tpu.memory_space<vmem>>, %arg10: memref<8x256xf32, #tpu.memory_space<vmem>>) attributes {dimension_semantics = [#tpu.dimension_semantics<parallel>], iteration_bounds = array<i64: 2>, scalar_prefetch = 0 : i64, scratch_operands = 1 : i64, tpu.core_type = #tpu.core_type<tc>, window_params = [{transform_indices = @transform_0, window_bounds = array<i64: 1, 256>}, {transform_indices = @transform_1, window_bounds = array<i64: 1, 256>}, {pipeline_mode = #tpu.pipeline_mode<synchronous>, transform_indices = @transform_2, window_bounds = array<i64: 32, 8>}, {pipeline_mode = #tpu.pipeline_mode<synchronous>, transform_indices = @transform_3, window_bounds = array<i64: 32, 1>}, {pipeline_mode = #tpu.pipeline_mode<synchronous>, transform_indices = @transform_4, window_bounds = array<i64: 32, 32>}, {pipeline_mode = #tpu.pipeline_mode<synchronous>, transform_indices = @transform_5, window_bounds = array<i64: 32, 1>}, {pipeline_mode = #tpu.pipeline_mode<synchronous>, transform_indices = @transform_6, window_bounds = array<i64: 32, 1>}, {transform_indices = @transform_7, window_bounds = array<i64: 1, 1>}, {transform_indices = @transform_8, window_bounds = array<i64: 1, 256>}]} {
    %c0 = arith.constant 0 : index
    %c0_0 = arith.constant 0 : index
    %0 = vector.load %arg1[%c0, %c0_0] : memref<1x256xf32, #tpu.memory_space<vmem>>, vector<1x256xf32>
    %c0_1 = arith.constant 0 : index
    %c0_2 = arith.constant 0 : index
    %1 = vector.load %arg2[%c0_1, %c0_2] : memref<1x256xf32, #tpu.memory_space<vmem>>, vector<1x256xf32>
    %c0_3 = arith.constant 0 : index
    %c0_4 = arith.constant 0 : index
    %2 = vector.load %arg10[%c0_3, %c0_4] : memref<8x256xf32, #tpu.memory_space<vmem>>, vector<1x256xf32>
    tpu.vector_store %arg10[%c0_3, %c0_4], %0 {strides = array<i32>} : memref<8x256xf32, #tpu.memory_space<vmem>>, vector<1x256xf32>,
    %c1 = arith.constant 1 : index
    %c0_5 = arith.constant 0 : index
    %3 = vector.load %arg10[%c1, %c0_5] : memref<8x256xf32, #tpu.memory_space<vmem>>, vector<1x256xf32>
    tpu.vector_store %arg10[%c1, %c0_5], %1 {strides = array<i32>} : memref<8x256xf32, #tpu.memory_space<vmem>>, vector<1x256xf32>,
    %cst = arith.constant 1.000000e-01 : f32
    %4 = vector.broadcast %cst : f32 to vector<1x256xf32>
    %5 = arith.addf %1, %4 : vector<1x256xf32>
    %6 = tpu.reciprocal %5 : vector<1x256xf32> -> vector<1x256xf32>
    %7 = arith.mulf %0, %6 : vector<1x256xf32>
    %c2 = arith.constant 2 : index
    %c0_6 = arith.constant 0 : index
    %8 = vector.load %arg10[%c2, %c0_6] : memref<8x256xf32, #tpu.memory_space<vmem>>, vector<1x256xf32>
    tpu.vector_store %arg10[%c2, %c0_6], %7 {strides = array<i32>} : memref<8x256xf32, #tpu.memory_space<vmem>>, vector<1x256xf32>,
    %cst_7 = arith.constant 1.000000e-01 : f32
    %9 = vector.broadcast %cst_7 : f32 to vector<1x256xf32>
    %10 = arith.addf %0, %9 : vector<1x256xf32>
    %11 = tpu.reciprocal %10 : vector<1x256xf32> -> vector<1x256xf32>
    %12 = arith.mulf %1, %11 : vector<1x256xf32>
    %c3 = arith.constant 3 : index
    %c0_8 = arith.constant 0 : index
    %13 = vector.load %arg10[%c3, %c0_8] : memref<8x256xf32, #tpu.memory_space<vmem>>, vector<1x256xf32>
    tpu.vector_store %arg10[%c3, %c0_8], %12 {strides = array<i32>} : memref<8x256xf32, #tpu.memory_space<vmem>>, vector<1x256xf32>,
    %cst_9 = arith.constant 0.000000e+00 : f32
    %14 = vector.broadcast %cst_9 : f32 to vector<4x256xf32>
    %c4 = arith.constant 4 : index
    %c0_10 = arith.constant 0 : index
    %15 = vector.load %arg10[%c4, %c0_10] : memref<8x256xf32, #tpu.memory_space<vmem>>, vector<4x256xf32>
    tpu.vector_store %arg10[%c4, %c0_10], %14 {strides = array<i32>} : memref<8x256xf32, #tpu.memory_space<vmem>>, vector<4x256xf32>,
    %c0_11 = arith.constant 0 : index
    %c0_12 = arith.constant 0 : index
    %16 = vector.load %arg3[%c0_11, %c0_12] : memref<32x8xf32, #tpu.memory_space<vmem>>, vector<32x8xf32>
    %c0_13 = arith.constant 0 : index
    %c0_14 = arith.constant 0 : index
    %17 = vector.load %arg10[%c0_13, %c0_14] : memref<8x256xf32, #tpu.memory_space<vmem>>, vector<8x256xf32>
    %cst_15 = arith.constant dense<0.000000e+00> : vector<32x256xf32>
    %18 = tpu.matmul %16, %17, %cst_15 {dimension_numbers = #tpu.dot_dimension_numbers<[1], [0], [0], [1], [0, 0, 1, 1], [], []>, precision = #tpu.contract_precision<fp32>} : vector<32x8xf32>, vector<8x256xf32>, vector<32x256xf32> -> vector<32x256xf32>
    %c0_16 = arith.constant 0 : index
    %c0_17 = arith.constant 0 : index
    %19 = vector.load %arg4[%c0_16, %c0_17] : memref<32x1xf32, #tpu.memory_space<vmem>>, vector<32x1xf32>
    %20 = vector.broadcast %19 : vector<32x1xf32> to vector<32x256xf32>
    %21 = arith.addf %18, %20 : vector<32x256xf32>
    %cst_18 = arith.constant 2.000000e-01 : f32
    %22 = vector.broadcast %cst_18 : f32 to vector<32x256xf32>
    %23 = arith.mulf %22, %21 : vector<32x256xf32>
    %24 = arith.maximumf %21, %23 : vector<32x256xf32>
    %c0_19 = arith.constant 0 : index
    %c0_20 = arith.constant 0 : index
    %25 = vector.load %arg5[%c0_19, %c0_20] : memref<32x32xf32, #tpu.memory_space<vmem>>, vector<32x32xf32>
    %cst_21 = arith.constant dense<0.000000e+00> : vector<32x256xf32>
    %26 = tpu.matmul %25, %24, %cst_21 {dimension_numbers = #tpu.dot_dimension_numbers<[1], [0], [0], [1], [0, 0, 1, 1], [], []>, precision = #tpu.contract_precision<fp32>} : vector<32x32xf32>, vector<32x256xf32>, vector<32x256xf32> -> vector<32x256xf32>
    %c0_22 = arith.constant 0 : index
    %c0_23 = arith.constant 0 : index
    %27 = vector.load %arg6[%c0_22, %c0_23] : memref<32x1xf32, #tpu.memory_space<vmem>>, vector<32x1xf32>
    %28 = vector.broadcast %27 : vector<32x1xf32> to vector<32x256xf32>
    %29 = arith.addf %26, %28 : vector<32x256xf32>
    %cst_24 = arith.constant 2.000000e-01 : f32
    %30 = vector.broadcast %cst_24 : f32 to vector<32x256xf32>
    %31 = arith.mulf %30, %29 : vector<32x256xf32>
    %32 = arith.maximumf %29, %31 : vector<32x256xf32>
    %c0_25 = arith.constant 0 : index
    %c0_26 = arith.constant 0 : index
    %33 = vector.load %arg7[%c0_25, %c0_26] : memref<32x1xf32, #tpu.memory_space<vmem>>, vector<32x1xf32>
    %34 = vector.broadcast %33 : vector<32x1xf32> to vector<32x256xf32>
    %35 = arith.mulf %32, %34 : vector<32x256xf32>
    %cst_27 = arith.constant dense<0.000000e+00> : vector<256xf32>
    %36 = vector.multi_reduction <add>, %35, %cst_27 [0] : vector<32x256xf32> to vector<256xf32>
    %37 = vector.shape_cast %36 : vector<256xf32> to vector<1x256xf32>
    %c0_28 = arith.constant 0 : index
    %c0_29 = arith.constant 0 : index
    %38 = memref.load %arg8[%c0_28, %c0_29] : memref<1x1xf32, #tpu.memory_space<smem>>
    %39 = vector.broadcast %38 : f32 to vector<1x256xf32>
    %40 = arith.addf %37, %39 : vector<1x256xf32>
    %41 = arith.negf %40 : vector<1x256xf32>
    %42 = math.exp %41 : vector<1x256xf32>
    %cst_30 = arith.constant 1.000000e+00 : f32
    %43 = vector.broadcast %cst_30 : f32 to vector<1x256xf32>
    %44 = arith.addf %43, %42 : vector<1x256xf32>
    %45 = arith.divf %43, %44 : vector<1x256xf32>
    %c0_31 = arith.constant 0 : index
    %c0_32 = arith.constant 0 : index
    %46 = vector.load %arg9[%c0_31, %c0_32] : memref<1x256xf32, #tpu.memory_space<vmem>>, vector<1x256xf32>
    tpu.vector_store %arg9[%c0_31, %c0_32], %45 {strides = array<i32>} : memref<1x256xf32, #tpu.memory_space<vmem>>, vector<1x256xf32>,
    return
  }
  func.func @transform_0(%arg0: i32) -> (i32, i32) {
    %c0_i32 = arith.constant 0 : i32
    %c0_i32_0 = arith.constant 0 : i32
    return %c0_i32, %arg0 : i32, i32
  }
  func.func @transform_1(%arg0: i32) -> (i32, i32) {
    %c0_i32 = arith.constant 0 : i32
    %c0_i32_0 = arith.constant 0 : i32
    return %c0_i32, %arg0 : i32, i32
  }
  func.func @transform_2(%arg0: i32) -> (i32, i32) {
    %c0_i32 = arith.constant 0 : i32
    %c0_i32_0 = arith.constant 0 : i32
    %c0_i32_1 = arith.constant 0 : i32
    return %c0_i32, %c0_i32_0 : i32, i32
  }
  func.func @transform_3(%arg0: i32) -> (i32, i32) {
    %c0_i32 = arith.constant 0 : i32
    %c0_i32_0 = arith.constant 0 : i32
    %c0_i32_1 = arith.constant 0 : i32
    return %c0_i32, %c0_i32_0 : i32, i32
  }
  func.func @transform_4(%arg0: i32) -> (i32, i32) {
    %c0_i32 = arith.constant 0 : i32
    %c0_i32_0 = arith.constant 0 : i32
    %c0_i32_1 = arith.constant 0 : i32
    return %c0_i32, %c0_i32_0 : i32, i32
  }
  func.func @transform_5(%arg0: i32) -> (i32, i32) {
    %c0_i32 = arith.constant 0 : i32
    %c0_i32_0 = arith.constant 0 : i32
    %c0_i32_1 = arith.constant 0 : i32
    return %c0_i32, %c0_i32_0 : i32, i32
  }
  func.func @transform_6(%arg0: i32) -> (i32, i32) {
    %c0_i32 = arith.constant 0 : i32
    %c0_i32_0 = arith.constant 0 : i32
    %c0_i32_1 = arith.constant 0 : i32
    return %c0_i32, %c0_i32_0 : i32, i32
  }
  func.func @transform_7(%arg0: i32) -> (i32, i32) {
    %c0_i32 = arith.constant 0 : i32
    %c0_i32_0 = arith.constant 0 : i32
    %c0_i32_1 = arith.constant 0 : i32
    return %c0_i32, %c0_i32_0 : i32, i32
  }
  func.func @transform_8(%arg0: i32) -> (i32, i32) {
    %c0_i32 = arith.constant 0 : i32
    %c0_i32_0 = arith.constant 0 : i32
    return %c0_i32, %arg0 : i32, i32
  }
}

</mosaic_0001>

<llo_original>
// kernel: dist2logit.1
$region0: #{dist2logit.1}
  #allocation0 [shape = 'u32[]', space=smem, size = 0x4, offset = 0x4, fixed_abs, tag = 'smem constant byte address 0x4 - core index']
  #allocation1 [shape = 'u32[144,128]{1,0:T(1,128)}', space=vmem, size = 0x12000, scoped, tag = 'internal scratch']
  #allocation2 [shape = 'f32[8,256]{1,0:T(8,128)}', space=vmem, size = 0x2000, scoped, tag = 'scratch operand']
  #allocation3 [shape = 'f32[1,1]{1,0:T(1,128)S(6)}', space=smem, size = 0x200, scoped, tag = 'scoped memory for dist2logit.1']
  %s0 = inlined_call_operand.vmem [shape: f32[1,512], index: 0, kind: input, shape index: {}]
  %s1 = inlined_call_operand.vmem [shape: f32[1,512], index: 1, kind: input, shape index: {}]
  %s2 = inlined_call_operand.vmem [shape: f32[32,8], index: 2, kind: input, shape index: {}]
  %s3 = inlined_call_operand.vmem [shape: f32[32,1], index: 3, kind: input, shape index: {}]
  %s4 = inlined_call_operand.vmem [shape: f32[32,32], index: 4, kind: input, shape index: {}]
  %s5 = inlined_call_operand.vmem [shape: f32[32,1], index: 5, kind: input, shape index: {}]
  %s6 = inlined_call_operand.vmem [shape: f32[32,1], index: 6, kind: input, shape index: {}]
  %s7 = inlined_call_operand.<no memory space> [shape: f32[1,1], index: 7, kind: input, shape index: {}]
  %s8 = inlined_call_operand.vmem [shape: f32[1,512], index: 8, kind: output, shape index: {}]
  %s9 = sld [smem:[#allocation0]]
  $region65: #{dist2logit.1} parent=0
    _
  %s11 = ssub.s32 1, %s9
  %s12 = scalar_select 0, %s11, %s9
  %13 = sst [smem:[#allocation3]] %s7
  loop: start=0, step=1, limit=4
  $region2: #{dist2logit.1} parent=0 // loop_pre_header
    _
  $region3: #{dist2logit.1} parent=0 // loop_header
    %s15 = sphi 0, %s19
    %p16 = scmp.ge.s32.totalorder %s15, 4
    %s25 = sphi 0, %s27
    %s28 = sphi 0, %s25
    %s29 = sphi 0, %s28
    %s45 = sphi 0, %s29
    %s51 = sphi 0, %s53
    %s54 = sphi 0, %s51
    %s55 = sphi 0, %s54
    %s71 = sphi 0, %s55
    %s75 = sphi 0, %s75
    %s77 = sphi 0, %s75
    %s78 = sphi 0, %s77
    %s92 = sphi 0, %s78
    %s96 = sphi 0, %s96
    %s98 = sphi 0, %s96
    %s99 = sphi 0, %s98
    %s113 = sphi 0, %s99
    %s117 = sphi 0, %s117
    %s119 = sphi 0, %s117
    %s120 = sphi 0, %s119
    %s134 = sphi 0, %s120
    %s138 = sphi 0, %s138
    %s140 = sphi 0, %s138
    %s141 = sphi 0, %s140
    %s155 = sphi 0, %s141
    %s159 = sphi 0, %s159
    %s161 = sphi 0, %s159
    %s162 = sphi 0, %s161
    %s176 = sphi 0, %s162
    %s180 = sphi 0, %s180
    %s182 = sphi 0, %s180
    %s183 = sphi 0, %s182
    %s197 = sphi 0, %s183
    %s203 = sphi 0, %s205
    %s206 = sphi 0, %s203
    %s207 = sphi 0, %s206
    %s223 = sphi 0, %s207
  $region4: #{dist2logit.1} parent=0 // loop_header_branch
    %18 = sbr.rel (%p16) target = $region8
  $region5: #{dist2logit.1} parent=0 // loop_body
    %s20 = ssub.s32 %s15, 1
    %s21 = ssub.s32 %s15, 2
    %s22 = sadd.s32 %s15, 1
    %s23 = ssub.s32 %s15, %s22
    %p24 = scmp.eq.s32.totalorder %s23, 0
    %s26 = sadd.s32 %s25, 1
    %s27 = scalar_select %p24, %s25, %s26
    %p30 = pneg %p24
    %p31 = scmp.eq.s32.totalorder %s15, 1
    %p32 = por %p30, %p31
    %p33 = scmp.ne.s32.totalorder %s25, %s28
    %p34 = scmp.eq.s32.totalorder %s15, 0
    %p35 = por %p33, %p34
    %p36 = scmp.ne.s32.totalorder %s25, %s28
    %p37 = scmp.eq.s32.totalorder %s20, 1
    %p38 = por %p36, %p37
    %p39 = scmp.ne.s32.totalorder %s28, %s29
    %p40 = scmp.eq.s32.totalorder %s20, 0
    %p41 = por %p39, %p40
    %p42 = scmp.ne.s32.totalorder %s28, %s29
    %p43 = scmp.eq.s32.totalorder %s21, 1
    %p44 = por %p42, %p43
    %p46 = scmp.ne.s32.totalorder %s29, %s45
    %p47 = scmp.eq.s32.totalorder %s21, 0
    %p48 = por %p46, %p47
    %s49 = ssub.s32 %s15, %s22
    %p50 = scmp.eq.s32.totalorder %s49, 0
    %s52 = sadd.s32 %s51, 1
    %s53 = scalar_select %p50, %s51, %s52
    %p56 = pneg %p50
    %p57 = scmp.eq.s32.totalorder %s15, 1
    %p58 = por %p56, %p57
    %p59 = scmp.ne.s32.totalorder %s51, %s54
    %p60 = scmp.eq.s32.totalorder %s15, 0
    %p61 = por %p59, %p60
    %p62 = scmp.ne.s32.totalorder %s51, %s54
    %p63 = scmp.eq.s32.totalorder %s20, 1
    %p64 = por %p62, %p63
    %p65 = scmp.ne.s32.totalorder %s54, %s55
    %p66 = scmp.eq.s32.totalorder %s20, 0
    %p67 = por %p65, %p66
    %p68 = scmp.ne.s32.totalorder %s54, %s55
    %p69 = scmp.eq.s32.totalorder %s21, 1
    %p70 = por %p68, %p69
    %p72 = scmp.ne.s32.totalorder %s55, %s71
    %p73 = scmp.eq.s32.totalorder %s21, 0
    %p74 = por %p72, %p73
    %s76 = sadd.s32 %s75, 1
    %p79 = scmp.eq.s32.totalorder %s15, 1
    %p80 = scmp.ne.s32.totalorder %s75, %s77
    %p81 = scmp.eq.s32.totalorder %s15, 0
    %p82 = por %p80, %p81
    %p83 = scmp.ne.s32.totalorder %s75, %s77
    %p84 = scmp.eq.s32.totalorder %s20, 1
    %p85 = por %p83, %p84
    %p86 = scmp.ne.s32.totalorder %s77, %s78
    %p87 = scmp.eq.s32.totalorder %s20, 0
    %p88 = por %p86, %p87
    %p89 = scmp.ne.s32.totalorder %s77, %s78
    %p90 = scmp.eq.s32.totalorder %s21, 1
    %p91 = por %p89, %p90
    %p93 = scmp.ne.s32.totalorder %s78, %s92
    %p94 = scmp.eq.s32.totalorder %s21, 0
    %p95 = por %p93, %p94
    %s97 = sadd.s32 %s96, 1
    %p100 = scmp.eq.s32.totalorder %s15, 1
    %p101 = scmp.ne.s32.totalorder %s96, %s98
    %p102 = scmp.eq.s32.totalorder %s15, 0
    %p103 = por %p101, %p102
    %p104 = scmp.ne.s32.totalorder %s96, %s98
    %p105 = scmp.eq.s32.totalorder %s20, 1
    %p106 = por %p104, %p105
    %p107 = scmp.ne.s32.totalorder %s98, %s99
    %p108 = scmp.eq.s32.totalorder %s20, 0
    %p109 = por %p107, %p108
    %p110 = scmp.ne.s32.totalorder %s98, %s99
    %p111 = scmp.eq.s32.totalorder %s21, 1
    %p112 = por %p110, %p111
    %p114 = scmp.ne.s32.totalorder %s99, %s113
    %p115 = scmp.eq.s32.totalorder %s21, 0
    %p116 = por %p114, %p115
    %s118 = sadd.s32 %s117, 1
    %p121 = scmp.eq.s32.totalorder %s15, 1
    %p122 = scmp.ne.s32.totalorder %s117, %s119
    %p123 = scmp.eq.s32.totalorder %s15, 0
    %p124 = por %p122, %p123
    %p125 = scmp.ne.s32.totalorder %s117, %s119
    %p126 = scmp.eq.s32.totalorder %s20, 1
    %p127 = por %p125, %p126
    %p128 = scmp.ne.s32.totalorder %s119, %s120
    %p129 = scmp.eq.s32.totalorder %s20, 0
    %p130 = por %p128, %p129
    %p131 = scmp.ne.s32.totalorder %s119, %s120
    %p132 = scmp.eq.s32.totalorder %s21, 1
    %p133 = por %p131, %p132
    %p135 = scmp.ne.s32.totalorder %s120, %s134
    %p136 = scmp.eq.s32.totalorder %s21, 0
    %p137 = por %p135, %p136
    %s139 = sadd.s32 %s138, 1
    %p142 = scmp.eq.s32.totalorder %s15, 1
    %p143 = scmp.ne.s32.totalorder %s138, %s140
    %p144 = scmp.eq.s32.totalorder %s15, 0
    %p145 = por %p143, %p144
    %p146 = scmp.ne.s32.totalorder %s138, %s140
    %p147 = scmp.eq.s32.totalorder %s20, 1
    %p148 = por %p146, %p147
    %p149 = scmp.ne.s32.totalorder %s140, %s141
    %p150 = scmp.eq.s32.totalorder %s20, 0
    %p151 = por %p149, %p150
    %p152 = scmp.ne.s32.totalorder %s140, %s141
    %p153 = scmp.eq.s32.totalorder %s21, 1
    %p154 = por %p152, %p153
    %p156 = scmp.ne.s32.totalorder %s141, %s155
    %p157 = scmp.eq.s32.totalorder %s21, 0
    %p158 = por %p156, %p157
    %s160 = sadd.s32 %s159, 1
    %p163 = scmp.eq.s32.totalorder %s15, 1
    %p164 = scmp.ne.s32.totalorder %s159, %s161
    %p165 = scmp.eq.s32.totalorder %s15, 0
    %p166 = por %p164, %p165
    %p167 = scmp.ne.s32.totalorder %s159, %s161
    %p168 = scmp.eq.s32.totalorder %s20, 1
    %p169 = por %p167, %p168
    %p170 = scmp.ne.s32.totalorder %s161, %s162
    %p171 = scmp.eq.s32.totalorder %s20, 0
    %p172 = por %p170, %p171
    %p173 = scmp.ne.s32.totalorder %s161, %s162
    %p174 = scmp.eq.s32.totalorder %s21, 1
    %p175 = por %p173, %p174
    %p177 = scmp.ne.s32.totalorder %s162, %s176
    %p178 = scmp.eq.s32.totalorder %s21, 0
    %p179 = por %p177, %p178
    %s181 = sadd.s32 %s180, 1
    %p184 = scmp.eq.s32.totalorder %s15, 1
    %p185 = scmp.ne.s32.totalorder %s180, %s182
    %p186 = scmp.eq.s32.totalorder %s15, 0
    %p187 = por %p185, %p186
    %p188 = scmp.ne.s32.totalorder %s180, %s182
    %p189 = scmp.eq.s32.totalorder %s20, 1
    %p190 = por %p188, %p189
    %p191 = scmp.ne.s32.totalorder %s182, %s183
    %p192 = scmp.eq.s32.totalorder %s20, 0
    %p193 = por %p191, %p192
    %p194 = scmp.ne.s32.totalorder %s182, %s183
    %p195 = scmp.eq.s32.totalorder %s21, 1
    %p196 = por %p194, %p195
    %p198 = scmp.ne.s32.totalorder %s183, %s197
    %p199 = scmp.eq.s32.totalorder %s21, 0
    %p200 = por %p198, %p199
    %s201 = ssub.s32 %s15, %s22
    %p202 = scmp.eq.s32.totalorder %s201, 0
    %s204 = sadd.s32 %s203, 1
    %s205 = scalar_select %p202, %s203, %s204
    %p208 = pneg %p202
    %p209 = scmp.eq.s32.totalorder %s15, 1
    %p210 = por %p208, %p209
    %p211 = scmp.ne.s32.totalorder %s203, %s206
    %p212 = scmp.eq.s32.totalorder %s15, 0
    %p213 = por %p211, %p212
    %p214 = scmp.ne.s32.totalorder %s203, %s206
    %p215 = scmp.eq.s32.totalorder %s20, 1
    %p216 = por %p214, %p215
    %p217 = scmp.ne.s32.totalorder %s206, %s207
    %p218 = scmp.eq.s32.totalorder %s20, 0
    %p219 = por %p217, %p218
    %p220 = scmp.ne.s32.totalorder %s206, %s207
    %p221 = scmp.eq.s32.totalorder %s21, 1
    %p222 = por %p220, %p221
    %p224 = scmp.ne.s32.totalorder %s207, %s223
    %p225 = scmp.eq.s32.totalorder %s21, 0
    %p226 = por %p224, %p225
    %p227 = scmp.le.s32.totalorder 1, %s15
    %p228 = scmp.lt.s32.totalorder %s15, 3
    %p229 = pnand %p227, %p228
    %p230 = pneg %p229
    // Predicated region
    $region9: #{dist2logit.1} parent=5 // pred_check
      _
    $region10: #{dist2logit.1} parent=5 // pred_check_branch
      %232 = sbr.rel (%p229) target = $region12
    $region11: #{dist2logit.1} parent=5 // pred_region
      %s233 = ssub.s32 %s15, 1
      // Predicated region
      $region13: #{dist2logit.1} parent=11 // pred_check
        %p234 = pneg %p88
      $region14: #{dist2logit.1} parent=11 // pred_check_branch
        %236 = sbr.rel (%p234) target = $region16
      $region15: #{dist2logit.1} parent=11 // pred_region
        _
      $region16: #{dist2logit.1} parent=11 // pred_fallthru
        _
      // Predicated region
      $region17: #{dist2logit.1} parent=11 // pred_check
        %p237 = pneg %p109
      $region18: #{dist2logit.1} parent=11 // pred_check_branch
        %239 = sbr.rel (%p237) target = $region20
      $region19: #{dist2logit.1} parent=11 // pred_region
        _
      $region20: #{dist2logit.1} parent=11 // pred_fallthru
        _
      // Predicated region
      $region21: #{dist2logit.1} parent=11 // pred_check
        %p240 = pneg %p130
      $region22: #{dist2logit.1} parent=11 // pred_check_branch
        %242 = sbr.rel (%p240) target = $region24
      $region23: #{dist2logit.1} parent=11 // pred_region
        _
      $region24: #{dist2logit.1} parent=11 // pred_fallthru
        _
      // Predicated region
      $region25: #{dist2logit.1} parent=11 // pred_check
        %p243 = pneg %p151
      $region26: #{dist2logit.1} parent=11 // pred_check_branch
        %245 = sbr.rel (%p243) target = $region28
      $region27: #{dist2logit.1} parent=11 // pred_region
        _
      $region28: #{dist2logit.1} parent=11 // pred_fallthru
        _
      // Predicated region
      $region29: #{dist2logit.1} parent=11 // pred_check
        %p246 = pneg %p172
      $region30: #{dist2logit.1} parent=11 // pred_check_branch
        %248 = sbr.rel (%p246) target = $region32
      $region31: #{dist2logit.1} parent=11 // pred_region
        _
      $region32: #{dist2logit.1} parent=11 // pred_fallthru
        _
      // Predicated region
      $region33: #{dist2logit.1} parent=11 // pred_check
        %p249 = pneg %p193
      $region34: #{dist2logit.1} parent=11 // pred_check_branch
        %251 = sbr.rel (%p249) target = $region36
      $region35: #{dist2logit.1} parent=11 // pred_region
        _
      $region36: #{dist2logit.1} parent=11 // pred_fallthru
        _
    $region12: #{dist2logit.1} parent=5 // pred_fallthru
      _
    %p252 = scmp.lt.s32.totalorder %s15, 2
    // Predicated region
    $region37: #{dist2logit.1} parent=5 // pred_check
      %p253 = pneg %p252
    $region38: #{dist2logit.1} parent=5 // pred_check_branch
      %255 = sbr.rel (%p253) target = $region40
    $region39: #{dist2logit.1} parent=5 // pred_region
      // Predicated region
      $region41: #{dist2logit.1} parent=39 // pred_check
        %p256 = pneg %p35
      $region42: #{dist2logit.1} parent=39 // pred_check_branch
        %258 = sbr.rel (%p256) target = $region44
      $region43: #{dist2logit.1} parent=39 // pred_region
        %s259 = smul.u32 2, %s15
        %p260 = scmp.lt.s32.totalorder %s259, 3
        %s261 = scalar_select %p260, %s259, 3
        %s262 = scalar_lea.vmem %s0, %s261
        %s263 = smul.u32 2, %s15
      $region44: #{dist2logit.1} parent=39 // pred_fallthru
        _
      // Predicated region
      $region45: #{dist2logit.1} parent=39 // pred_check
        %p264 = pneg %p61
      $region46: #{dist2logit.1} parent=39 // pred_check_branch
        %266 = sbr.rel (%p264) target = $region48
      $region47: #{dist2logit.1} parent=39 // pred_region
        %s267 = smul.u32 2, %s15
        %p268 = scmp.lt.s32.totalorder %s267, 3
        %s269 = scalar_select %p268, %s267, 3
        %s270 = scalar_lea.vmem %s1, %s269
        %s271 = smul.u32 2, %s15
      $region48: #{dist2logit.1} parent=39 // pred_fallthru
        _
    $region40: #{dist2logit.1} parent=5 // pred_fallthru
      _
    %p272 = scmp.le.s32.totalorder 1, %s15
    %p273 = scmp.lt.s32.totalorder %s15, 3
    %p274 = pnand %p272, %p273
    %p275 = pneg %p274
    // Predicated region
    $region49: #{dist2logit.1} parent=5 // pred_check
      _
    $region50: #{dist2logit.1} parent=5 // pred_check_branch
      %277 = sbr.rel (%p274) target = $region52
    $region51: #{dist2logit.1} parent=5 // pred_region
      %s278 = ssub.s32 %s15, 1
      %s279 = smul.u32 2, %s20
      %p280 = scmp.lt.s32.totalorder %s279, 3
      %s281 = scalar_select %p280, %s279, 3
      %s282 = scalar_lea.vmem %s0, %s281
      %p283 = pneg %p41
      %p284 = pneg %p38
      %s285 = smul.u32 2, %s20
      %p286 = scmp.lt.s32.totalorder %s285, 3
      %s287 = scalar_select %p286, %s285, 3
      %s288 = scalar_lea.vmem %s1, %s287
      %p289 = pneg %p67
      %p290 = pneg %p64
      %p291 = pneg %p88
      %p292 = pneg %p85
      %p293 = pneg %p109
      %p294 = pneg %p106
      %p295 = pneg %p130
      %p296 = pneg %p127
      %p297 = pneg %p151
      %p298 = pneg %p148
      %p299 = pneg %p172
      %p300 = pneg %p169
      %p301 = pneg %p193
      %p302 = pneg %p190
      %p303 = pneg %p219
      %p304 = pneg %p216
      %s305 = smul.u32 2, %s20
      %p306 = scmp.lt.s32.totalorder %s305, 3
      %s307 = scalar_select %p306, %s305, 3
      %s308 = scalar_lea.vmem %s8, %s307
      %s309 = smul.u32 2, %s20
      %p310 = scmp.lt.s32.totalorder %s309, 3
      %s311 = scalar_select %p310, %s309, 3
      %s312 = scalar_lea.vmem %s0, %s311
      %s313 = smul.u32 2, %s20
      %s314 = smul.u32 2, %s20
      %p315 = scmp.lt.s32.totalorder %s314, 3
      %s316 = scalar_select %p315, %s314, 3
      %s317 = scalar_lea.vmem %s1, %s316
      %s318 = smul.u32 2, %s20
      %s319 = smul.u32 2, %s20
      %p320 = scmp.lt.s32.totalorder %s319, 3
      %s321 = scalar_select %p320, %s319, 3
      %s322 = scalar_lea.vmem %s8, %s321
      %s323 = smul.u32 2, %s20
      %v324 = vld [vmem:[%s312] sm:$0x3]
      %v325 = vld [vmem:[%s317] sm:$0x3]
      %v326 = vlaneseq
      %vm327 = vcmp.ge.s32.totalorder %v326, 0
      %vm328 = vcmp.lt.s32.totalorder %v326, 256
      %vm329 = vmand %vm327, %vm328
      %330 = vst.msk [vmem:[#allocation2] ss:$8 sm:$0x3] %vm329, %v324
      %331 = vst.msk [vmem:[#allocation2] ss:$8 sm:$0x0] %vm329, %v324
      %s332 = scalar_lea.vmem [#allocation2], 1
      %333 = vst.msk [vmem:[%s332] ss:$8 sm:$0x3] %vm329, %v325
      %334 = vst.msk [vmem:[%s332] ss:$8 sm:$0x0] %vm329, %v325
      %v335 = vadd.f32 %v325, 0.1
      %v336 = vrcp.pop %v335
      %v337 = vmul.f32 %v324, %v336
      %s338 = scalar_lea.vmem [#allocation2], 2
      %339 = vst.msk [vmem:[%s338] ss:$8 sm:$0x3] %vm329, %v337
      %340 = vst.msk [vmem:[%s338] ss:$8 sm:$0x0] %vm329, %v337
      %v341 = vadd.f32 %v324, 0.1
      %v342 = vrcp.pop %v341
      %v343 = vmul.f32 %v325, %v342
      %s344 = scalar_lea.vmem [#allocation2], 3
      %345 = vst.msk [vmem:[%s344] ss:$8 sm:$0x3] %vm329, %v343
      %346 = vst.msk [vmem:[%s344] ss:$8 sm:$0x0] %vm329, %v343
      %347 = vst [vmem:[#allocation2] sm:$0xf0] 0.0
      %348 = vst [vmem:[#allocation2 + $0x8] sm:$0xf0] 0.0
      %v349 = vld [vmem:[%s2] sm:$0xff]
      %v350 = vld [vmem:[%s2 + $0x8] sm:$0xff]
      %v351 = vld [vmem:[%s2 + $0x10] sm:$0xff]
      %v352 = vld [vmem:[%s2 + $0x18] sm:$0xff]
      %v353 = vld [vmem:[#allocation2] sm:$0xff]
      %v354 = vld [vmem:[#allocation2 + $0x8] sm:$0xff]
      %v355 = vld [vmem:[%s3] sm:$0xff]
      %v356 = vld [vmem:[%s3 + $0x8] sm:$0xff]
      %v357 = vld [vmem:[%s3 + $0x10] sm:$0xff]
      %v358 = vld [vmem:[%s3 + $0x18] sm:$0xff]
      %360 = vset.pattern.permute.xlu0 0
      %361 = vperm.xlu0 %360, %v355
      %v362 = vpop.permute.xlu0 %361
      %365 = vset.pattern.permute.xlu0 0
      %366 = vperm.xlu0 %365, %v356
      %v367 = vpop.permute.xlu0 %366
      %370 = vset.pattern.permute.xlu0 0
      %371 = vperm.xlu0 %370, %v357
      %v372 = vpop.permute.xlu0 %371
      %375 = vset.pattern.permute.xlu0 0
      %376 = vperm.xlu0 %375, %v358
      %v377 = vpop.permute.xlu0 %376
      %vm379 = vcmask 64512
      %v381 = vsel %vm379, %v349, 0
      %v384 = vsel %vm379, %v350, 0
      %v387 = vsel %vm379, %v351, 0
      %v390 = vsel %vm379, %v352, 0
      %v392 = vand.u32 %v354, 4294901760
      %393 = vmatprep.subr.mxu0 %v392
      %v394 = vand.u32 %v353, 4294901760
      %395 = vmatpush1.msra.mxu0 %v394
      %396 = vmatprep.subr.mxu0 0.0
      %397 = vmatpush1.msra.mxu0 0.0
      %398 = vmatprep.subr.mxu0 0.0
      %399 = vmatpush1.msra.mxu0 0.0
      %400 = vmatprep.subr.mxu0 0.0
      %401 = vmatpush1.msra.mxu0 0.0
      %402 = vmatprep.subr.mxu0 0.0
      %403 = vmatpush1.msra.mxu0 0.0
      %404 = vmatprep.subr.mxu0 0.0
      %405 = vmatpush1.msra.mxu0 0.0
      %406 = vmatprep.subr.mxu0 0.0
      %407 = vmatpush1.msra.mxu0 0.0
      %408 = vmatprep.subr.mxu0 0.0
      %409 = vmatpush1.msra.mxu0 0.0
      %410 = vmatprep.subr.mxu0 0.0
      %411 = vmatpush1.msra.mxu0 0.0
      %412 = vmatprep.subr.mxu0 0.0
      %413 = vmatpush1.msra.mxu0 0.0
      %414 = vmatprep.subr.mxu0 0.0
      %415 = vmatpush1.msra.mxu0 0.0
      %416 = vmatprep.subr.mxu0 0.0
      %417 = vmatpush1.msra.mxu0 0.0
      %418 = vmatprep.subr.mxu0 0.0
      %419 = vmatpush1.msra.mxu0 0.0
      %420 = vmatprep.subr.mxu0 0.0
      %421 = vmatpush1.msra.mxu0 0.0
      %422 = vmatprep.subr.mxu0 0.0
      %423 = vmatpush1.msra.mxu0 0.0
      %424 = vmatprep.subr.mxu0 0.0
      %425 = vmatpush1.msra.mxu0 0.0
      %426 = vmatprep.subr.mxu0 0.0
      %427 = vmatpush1.msra.mxu0 0.0
      %428 = vmatprep.subr.mxu0 0.0
      %429 = vmatpush1.msra.mxu0 0.0
      %430 = vmatprep.subr.mxu0 0.0
      %431 = vmatpush1.msra.mxu0 0.0
      %432 = vmatprep.subr.mxu0 0.0
      %433 = vmatpush1.msra.mxu0 0.0
      %434 = vmatprep.subr.mxu0 0.0
      %435 = vmatpush1.msra.mxu0 0.0
      %436 = vmatprep.subr.mxu0 0.0
      %437 = vmatpush1.msra.mxu0 0.0
      %438 = vmatprep.subr.mxu0 0.0
      %439 = vmatpush1.msra.mxu0 0.0
      %440 = vmatprep.subr.mxu0 0.0
      %441 = vmatpush1.msra.mxu0 0.0
      %442 = vmatprep.subr.mxu0 0.0
      %443 = vmatpush1.msra.mxu0 0.0
      %444 = vmatprep.subr.mxu0 0.0
      %445 = vmatpush1.msra.mxu0 0.0
      %446 = vmatprep.subr.mxu0 0.0
      %447 = vmatpush1.msra.mxu0 0.0
      %448 = vmatprep.subr.mxu0 0.0
      %449 = vmatpush1.msra.mxu0 0.0
      %450 = vmatprep.subr.mxu0 0.0
      %451 = vmatpush1.msra.mxu0 0.0
      %452 = vmatprep.subr.mxu0 0.0
      %453 = vmatpush1.msra.mxu0 0.0
      %454 = vmatprep.subr.mxu0 0.0
      %455 = vmatpush1.msra.mxu0 0.0
      %456 = vmatprep.subr.mxu0 0.0
      %457 = vmatpush1.msra.mxu0 0.0
      %458 = vmatprep.mubr.f32.mxu0 0.0
      %v459 = vand.u32 %v381, 4294901760
      %v460 = vsub.f32 %v381, %v459
      %v461 = vand.u32 %v460, 4294901760
      %v462 = vsub.f32 %v460, %v461
      %v463 = vand.u32 %v462, 4294901760
      %464 = vmatmul.mubr.f32.gmra.mrb[0].mxu0 %v463
      %v465 = vpop.f32.mrb[0].mxu0
      %v466 = vadd.f32 %v362, %v465
      %v467 = vpop.f32.mrb[0].mxu0
      %v468 = vadd.f32 %v362, %v467
      %469 = vmatprep.mubr.f32.mxu0 0.0
      %v470 = vand.u32 %v384, 4294901760
      %v471 = vsub.f32 %v384, %v470
      %v472 = vand.u32 %v471, 4294901760
      %v473 = vsub.f32 %v471, %v472
      %v474 = vand.u32 %v473, 4294901760
      %475 = vmatmul.mubr.f32.gmra.mrb[0].mxu0 %v474
      %v476 = vpop.f32.mrb[0].mxu0
      %v477 = vadd.f32 %v367, %v476
      %v478 = vpop.f32.mrb[0].mxu0
      %v479 = vadd.f32 %v367, %v478
      %480 = vmatprep.mubr.f32.mxu0 0.0
      %v481 = vand.u32 %v387, 4294901760
      %v482 = vsub.f32 %v387, %v481
      %v483 = vand.u32 %v482, 4294901760
      %v484 = vsub.f32 %v482, %v483
      %v485 = vand.u32 %v484, 4294901760
      %486 = vmatmul.mubr.f32.gmra.mrb[0].mxu0 %v485
      %v487 = vpop.f32.mrb[0].mxu0
      %v488 = vadd.f32 %v372, %v487
      %v489 = vpop.f32.mrb[0].mxu0
      %v490 = vadd.f32 %v372, %v489
      %491 = vmatprep.mubr.f32.mxu0 0.0
      %v492 = vand.u32 %v390, 4294901760
      %v493 = vsub.f32 %v390, %v492
      %v494 = vand.u32 %v493, 4294901760
      %v495 = vsub.f32 %v493, %v494
      %v496 = vand.u32 %v495, 4294901760
      %497 = vmatmul.mubr.f32.gmra.mrb[0].mxu0 %v496
      %v498 = vpop.f32.mrb[0].mxu0
      %v499 = vadd.f32 %v377, %v498
      %v500 = vpop.f32.mrb[0].mxu0
      %v501 = vadd.f32 %v377, %v500
      %502 = vdwg.mxu0
      %v503 = vand.u32 %v354, 4294901760
      %v504 = vsub.f32 %v354, %v503
      %v505 = vand.u32 %v504, 4294901760
      %v506 = vsub.f32 %v504, %v505
      %v507 = vand.u32 %v506, 4294901760
      %508 = vmatprep.subr.mxu0 %v507
      %v509 = vand.u32 %v353, 4294901760
      %v510 = vsub.f32 %v353, %v509
      %v511 = vand.u32 %v510, 4294901760
      %v512 = vsub.f32 %v510, %v511
      %v513 = vand.u32 %v512, 4294901760
      %514 = vmatpush1.msra.mxu0 %v513
      %515 = vmatprep.subr.mxu0 0.0
      %516 = vmatpush1.msra.mxu0 0.0
      %517 = vmatprep.subr.mxu0 0.0
      %518 = vmatpush1.msra.mxu0 0.0
      %519 = vmatprep.subr.mxu0 0.0
      %520 = vmatpush1.msra.mxu0 0.0
      %521 = vmatprep.subr.mxu0 0.0
      %522 = vmatpush1.msra.mxu0 0.0
      %523 = vmatprep.subr.mxu0 0.0
      %524 = vmatpush1.msra.mxu0 0.0
      %525 = vmatprep.subr.mxu0 0.0
      %526 = vmatpush1.msra.mxu0 0.0
      %527 = vmatprep.subr.mxu0 0.0
      %528 = vmatpush1.msra.mxu0 0.0
      %529 = vmatprep.subr.mxu0 0.0
      %530 = vmatpush1.msra.mxu0 0.0
      %531 = vmatprep.subr.mxu0 0.0
      %532 = vmatpush1.msra.mxu0 0.0
      %533 = vmatprep.subr.mxu0 0.0
      %534 = vmatpush1.msra.mxu0 0.0
      %535 = vmatprep.subr.mxu0 0.0
      %536 = vmatpush1.msra.mxu0 0.0
      %537 = vmatprep.subr.mxu0 0.0
      %538 = vmatpush1.msra.mxu0 0.0
      %539 = vmatprep.subr.mxu0 0.0
      %540 = vmatpush1.msra.mxu0 0.0
      %541 = vmatprep.subr.mxu0 0.0
      %542 = vmatpush1.msra.mxu0 0.0
      %543 = vmatprep.subr.mxu0 0.0
      %544 = vmatpush1.msra.mxu0 0.0
      %545 = vmatprep.subr.mxu0 0.0
      %546 = vmatpush1.msra.mxu0 0.0
      %547 = vmatprep.subr.mxu0 0.0
      %548 = vmatpush1.msra.mxu0 0.0
      %549 = vmatprep.subr.mxu0 0.0
      %550 = vmatpush1.msra.mxu0 0.0
      %551 = vmatprep.subr.mxu0 0.0
      %552 = vmatpush1.msra.mxu0 0.0
      %553 = vmatprep.subr.mxu0 0.0
      %554 = vmatpush1.msra.mxu0 0.0
      %555 = vmatprep.subr.mxu0 0.0
      %556 = vmatpush1.msra.mxu0 0.0
      %557 = vmatprep.subr.mxu0 0.0
      %558 = vmatpush1.msra.mxu0 0.0
      %559 = vmatprep.subr.mxu0 0.0
      %560 = vmatpush1.msra.mxu0 0.0
      %561 = vmatprep.subr.mxu0 0.0
      %562 = vmatpush1.msra.mxu0 0.0
      %563 = vmatprep.subr.mxu0 0.0
      %564 = vmatpush1.msra.mxu0 0.0
      %565 = vmatprep.subr.mxu0 0.0
      %566 = vmatpush1.msra.mxu0 0.0
      %567 = vmatprep.subr.mxu0 0.0
      %568 = vmatpush1.msra.mxu0 0.0
      %569 = vmatprep.subr.mxu0 0.0
      %570 = vmatpush1.msra.mxu0 0.0
      %571 = vmatprep.subr.mxu0 0.0
      %572 = vmatpush1.msra.mxu0 0.0
      %573 = vmatprep.subr.mxu0 0.0
      %574 = vmatpush1.msra.mxu0 0.0
      %575 = vmatprep.subr.mxu0 0.0
      %576 = vmatpush1.msra.mxu0 0.0
      %577 = vmatprep.mubr.f32.mxu0 0.0
      %v578 = vand.u32 %v381, 4294901760
      %579 = vmatmul.mubr.f32.gmra.mrb[0].mxu0 %v578
      %v580 = vpop.f32.mrb[0].mxu0
      %v581 = vadd.f32 %v466, %v580
      %v582 = vpop.f32.mrb[0].mxu0
      %v583 = vadd.f32 %v468, %v582
      %584 = vmatprep.mubr.f32.mxu0 0.0
      %v585 = vand.u32 %v384, 4294901760
      %586 = vmatmul.mubr.f32.gmra.mrb[0].mxu0 %v585
      %v587 = vpop.f32.mrb[0].mxu0
      %v588 = vadd.f32 %v477, %v587
      %v589 = vpop.f32.mrb[0].mxu0
      %v590 = vadd.f32 %v479, %v589
      %591 = vmatprep.mubr.f32.mxu0 0.0
      %v592 = vand.u32 %v387, 4294901760
      %593 = vmatmul.mubr.f32.gmra.mrb[0].mxu0 %v592
      %v594 = vpop.f32.mrb[0].mxu0
      %v595 = vadd.f32 %v488, %v594
      %v596 = vpop.f32.mrb[0].mxu0
      %v597 = vadd.f32 %v490, %v596
      %598 = vmatprep.mubr.f32.mxu0 0.0
      %v599 = vand.u32 %v390, 4294901760
      %600 = vmatmul.mubr.f32.gmra.mrb[0].mxu0 %v599
      %v601 = vpop.f32.mrb[0].mxu0
      %v602 = vadd.f32 %v499, %v601
      %v603 = vpop.f32.mrb[0].mxu0
      %v604 = vadd.f32 %v501, %v603
      %605 = vdwg.mxu0
      %v606 = vand.u32 %v354, 4294901760
      %v607 = vsub.f32 %v354, %v606
      %608 = vmatprep.subr.mxu0 %v607
      %v609 = vand.u32 %v353, 4294901760
      %v610 = vsub.f32 %v353, %v609
      %611 = vmatpush1.msra.mxu0 %v610
      %612 = vmatprep.subr.mxu0 0.0
      %613 = vmatpush1.msra.mxu0 0.0
      %614 = vmatprep.subr.mxu0 0.0
      %615 = vmatpush1.msra.mxu0 0.0
      %616 = vmatprep.subr.mxu0 0.0
      %617 = vmatpush1.msra.mxu0 0.0
      %618 = vmatprep.subr.mxu0 0.0
      %619 = vmatpush1.msra.mxu0 0.0
      %620 = vmatprep.subr.mxu0 0.0
      %621 = vmatpush1.msra.mxu0 0.0
      %622 = vmatprep.subr.mxu0 0.0
      %623 = vmatpush1.msra.mxu0 0.0
      %624 = vmatprep.subr.mxu0 0.0
      %625 = vmatpush1.msra.mxu0 0.0
      %626 = vmatprep.subr.mxu0 0.0
      %627 = vmatpush1.msra.mxu0 0.0
      %628 = vmatprep.subr.mxu0 0.0
      %629 = vmatpush1.msra.mxu0 0.0
      %630 = vmatprep.subr.mxu0 0.0
      %631 = vmatpush1.msra.mxu0 0.0
      %632 = vmatprep.subr.mxu0 0.0
      %633 = vmatpush1.msra.mxu0 0.0
      %634 = vmatprep.subr.mxu0 0.0
      %635 = vmatpush1.msra.mxu0 0.0
      %636 = vmatprep.subr.mxu0 0.0
      %637 = vmatpush1.msra.mxu0 0.0
      %638 = vmatprep.subr.mxu0 0.0
      %639 = vmatpush1.msra.mxu0 0.0
      %640 = vmatprep.subr.mxu0 0.0
      %641 = vmatpush1.msra.mxu0 0.0
      %642 = vmatprep.subr.mxu0 0.0
      %643 = vmatpush1.msra.mxu0 0.0
      %644 = vmatprep.subr.mxu0 0.0
      %645 = vmatpush1.msra.mxu0 0.0
      %646 = vmatprep.subr.mxu0 0.0
      %647 = vmatpush1.msra.mxu0 0.0
      %648 = vmatprep.subr.mxu0 0.0
      %649 = vmatpush1.msra.mxu0 0.0
      %650 = vmatprep.subr.mxu0 0.0
      %651 = vmatpush1.msra.mxu0 0.0
      %652 = vmatprep.subr.mxu0 0.0
      %653 = vmatpush1.msra.mxu0 0.0
      %654 = vmatprep.subr.mxu0 0.0
      %655 = vmatpush1.msra.mxu0 0.0
      %656 = vmatprep.subr.mxu0 0.0
      %657 = vmatpush1.msra.mxu0 0.0
      %658 = vmatprep.subr.mxu0 0.0
      %659 = vmatpush1.msra.mxu0 0.0
      %660 = vmatprep.subr.mxu0 0.0
      %661 = vmatpush1.msra.mxu0 0.0
      %662 = vmatprep.subr.mxu0 0.0
      %663 = vmatpush1.msra.mxu0 0.0
      %664 = vmatprep.subr.mxu0 0.0
      %665 = vmatpush1.msra.mxu0 0.0
      %666 = vmatprep.subr.mxu0 0.0
      %667 = vmatpush1.msra.mxu0 0.0
      %668 = vmatprep.subr.mxu0 0.0
      %669 = vmatpush1.msra.mxu0 0.0
      %670 = vmatprep.subr.mxu0 0.0
      %671 = vmatpush1.msra.mxu0 0.0
      %672 = vmatprep.subr.mxu0 0.0
      %673 = vmatpush1.msra.mxu0 0.0
      %674 = vmatprep.mubr.f32.mxu0 0.0
      %v675 = vand.u32 %v381, 4294901760
      %v676 = vsub.f32 %v381, %v675
      %677 = vmatmul.mubr.f32.gmra.mrb[0].mxu0 %v676
      %v678 = vpop.f32.mrb[0].mxu0
      %v679 = vadd.f32 %v581, %v678
      %v680 = vpop.f32.mrb[0].mxu0
      %v681 = vadd.f32 %v583, %v680
      %682 = vmatprep.mubr.f32.mxu0 0.0
      %v683 = vand.u32 %v384, 4294901760
      %v684 = vsub.f32 %v384, %v683
      %685 = vmatmul.mubr.f32.gmra.mrb[0].mxu0 %v684
      %v686 = vpop.f32.mrb[0].mxu0
      %v687 = vadd.f32 %v588, %v686
      %v688 = vpop.f32.mrb[0].mxu0
      %v689 = vadd.f32 %v590, %v688
      %690 = vmatprep.mubr.f32.mxu0 0.0
      %v691 = vand.u32 %v387, 4294901760
      %v692 = vsub.f32 %v387, %v691
      %693 = vmatmul.mubr.f32.gmra.mrb[0].mxu0 %v692
      %v694 = vpop.f32.mrb[0].mxu0
      %v695 = vadd.f32 %v595, %v694
      %v696 = vpop.f32.mrb[0].mxu0
      %v697 = vadd.f32 %v597, %v696
      %698 = vmatprep.mubr.f32.mxu0 0.0
      %v699 = vand.u32 %v390, 4294901760
      %v700 = vsub.f32 %v390, %v699
      %701 = vmatmul.mubr.f32.gmra.mrb[0].mxu0 %v700
      %v702 = vpop.f32.mrb[0].mxu0
      %v703 = vadd.f32 %v602, %v702
      %v704 = vpop.f32.mrb[0].mxu0
      %v705 = vadd.f32 %v604, %v704
      %706 = vdwg.mxu0
      %v707 = vand.u32 %v354, 4294901760
      %708 = vmatprep.subr.mxu0 %v707
      %v709 = vand.u32 %v353, 4294901760
      %710 = vmatpush1.msra.mxu0 %v709
      %711 = vmatprep.subr.mxu0 0.0
      %712 = vmatpush1.msra.mxu0 0.0
      %713 = vmatprep.subr.mxu0 0.0
      %714 = vmatpush1.msra.mxu0 0.0
      %715 = vmatprep.subr.mxu0 0.0
      %716 = vmatpush1.msra.mxu0 0.0
      %717 = vmatprep.subr.mxu0 0.0
      %718 = vmatpush1.msra.mxu0 0.0
      %719 = vmatprep.subr.mxu0 0.0
      %720 = vmatpush1.msra.mxu0 0.0
      %721 = vmatprep.subr.mxu0 0.0
      %722 = vmatpush1.msra.mxu0 0.0
      %723 = vmatprep.subr.mxu0 0.0
      %724 = vmatpush1.msra.mxu0 0.0
      %725 = vmatprep.subr.mxu0 0.0
      %726 = vmatpush1.msra.mxu0 0.0
      %727 = vmatprep.subr.mxu0 0.0
      %728 = vmatpush1.msra.mxu0 0.0
      %729 = vmatprep.subr.mxu0 0.0
      %730 = vmatpush1.msra.mxu0 0.0
      %731 = vmatprep.subr.mxu0 0.0
      %732 = vmatpush1.msra.mxu0 0.0
      %733 = vmatprep.subr.mxu0 0.0
      %734 = vmatpush1.msra.mxu0 0.0
      %735 = vmatprep.subr.mxu0 0.0
      %736 = vmatpush1.msra.mxu0 0.0
      %737 = vmatprep.subr.mxu0 0.0
      %738 = vmatpush1.msra.mxu0 0.0
      %739 = vmatprep.subr.mxu0 0.0
      %740 = vmatpush1.msra.mxu0 0.0
      %741 = vmatprep.subr.mxu0 0.0
      %742 = vmatpush1.msra.mxu0 0.0
      %743 = vmatprep.subr.mxu0 0.0
      %744 = vmatpush1.msra.mxu0 0.0
      %745 = vmatprep.subr.mxu0 0.0
      %746 = vmatpush1.msra.mxu0 0.0
      %747 = vmatprep.subr.mxu0 0.0
      %748 = vmatpush1.msra.mxu0 0.0
      %749 = vmatprep.subr.mxu0 0.0
      %750 = vmatpush1.msra.mxu0 0.0
      %751 = vmatprep.subr.mxu0 0.0
      %752 = vmatpush1.msra.mxu0 0.0
      %753 = vmatprep.subr.mxu0 0.0
      %754 = vmatpush1.msra.mxu0 0.0
      %755 = vmatprep.subr.mxu0 0.0
      %756 = vmatpush1.msra.mxu0 0.0
      %757 = vmatprep.subr.mxu0 0.0
      %758 = vmatpush1.msra.mxu0 0.0
      %759 = vmatprep.subr.mxu0 0.0
      %760 = vmatpush1.msra.mxu0 0.0
      %761 = vmatprep.subr.mxu0 0.0
      %762 = vmatpush1.msra.mxu0 0.0
      %763 = vmatprep.subr.mxu0 0.0
      %764 = vmatpush1.msra.mxu0 0.0
      %765 = vmatprep.subr.mxu0 0.0
      %766 = vmatpush1.msra.mxu0 0.0
      %767 = vmatprep.subr.mxu0 0.0
      %768 = vmatpush1.msra.mxu0 0.0
      %769 = vmatprep.subr.mxu0 0.0
      %770 = vmatpush1.msra.mxu0 0.0
      %771 = vmatprep.subr.mxu0 0.0
      %772 = vmatpush1.msra.mxu0 0.0
      %773 = vmatprep.mubr.f32.mxu0 0.0
      %v774 = vand.u32 %v381, 4294901760
      %v775 = vsub.f32 %v381, %v774
      %v776 = vand.u32 %v775, 4294901760
      %777 = vmatmul.mubr.f32.gmra.mrb[0].mxu0 %v776
      %v778 = vpop.f32.mrb[0].mxu0
      %v779 = vadd.f32 %v679, %v778
      %v780 = vpop.f32.mrb[0].mxu0
      %v781 = vadd.f32 %v681, %v780
      %782 = vmatprep.mubr.f32.mxu0 0.0
      %v783 = vand.u32 %v384, 4294901760
      %v784 = vsub.f32 %v384, %v783
      %v785 = vand.u32 %v784, 4294901760
      %786 = vmatmul.mubr.f32.gmra.mrb[0].mxu0 %v785
      %v787 = vpop.f32.mrb[0].mxu0
      %v788 = vadd.f32 %v687, %v787
      %v789 = vpop.f32.mrb[0].mxu0
      %v790 = vadd.f32 %v689, %v789
      %791 = vmatprep.mubr.f32.mxu0 0.0
      %v792 = vand.u32 %v387, 4294901760
      %v793 = vsub.f32 %v387, %v792
      %v794 = vand.u32 %v793, 4294901760
      %795 = vmatmul.mubr.f32.gmra.mrb[0].mxu0 %v794
      %v796 = vpop.f32.mrb[0].mxu0
      %v797 = vadd.f32 %v695, %v796
      %v798 = vpop.f32.mrb[0].mxu0
      %v799 = vadd.f32 %v697, %v798
      %800 = vmatprep.mubr.f32.mxu0 0.0
      %v801 = vand.u32 %v390, 4294901760
      %v802 = vsub.f32 %v390, %v801
      %v803 = vand.u32 %v802, 4294901760
      %804 = vmatmul.mubr.f32.gmra.mrb[0].mxu0 %v803
      %v805 = vpop.f32.mrb[0].mxu0
      %v806 = vadd.f32 %v703, %v805
      %v807 = vpop.f32.mrb[0].mxu0
      %v808 = vadd.f32 %v705, %v807
      %809 = vdwg.mxu0
      %v810 = vand.u32 %v354, 4294901760
      %v811 = vsub.f32 %v354, %v810
      %v812 = vand.u32 %v811, 4294901760
      %813 = vmatprep.subr.mxu0 %v812
      %v814 = vand.u32 %v353, 4294901760
      %v815 = vsub.f32 %v353, %v814
      %v816 = vand.u32 %v815, 4294901760
      %817 = vmatpush1.msra.mxu0 %v816
      %818 = vmatprep.subr.mxu0 0.0
      %819 = vmatpush1.msra.mxu0 0.0
      %820 = vmatprep.subr.mxu0 0.0
      %821 = vmatpush1.msra.mxu0 0.0
      %822 = vmatprep.subr.mxu0 0.0
      %823 = vmatpush1.msra.mxu0 0.0
      %824 = vmatprep.subr.mxu0 0.0
      %825 = vmatpush1.msra.mxu0 0.0
      %826 = vmatprep.subr.mxu0 0.0
      %827 = vmatpush1.msra.mxu0 0.0
      %828 = vmatprep.subr.mxu0 0.0
      %829 = vmatpush1.msra.mxu0 0.0
      %830 = vmatprep.subr.mxu0 0.0
      %831 = vmatpush1.msra.mxu0 0.0
      %832 = vmatprep.subr.mxu0 0.0
      %833 = vmatpush1.msra.mxu0 0.0
      %834 = vmatprep.subr.mxu0 0.0
      %835 = vmatpush1.msra.mxu0 0.0
      %836 = vmatprep.subr.mxu0 0.0
      %837 = vmatpush1.msra.mxu0 0.0
      %838 = vmatprep.subr.mxu0 0.0
      %839 = vmatpush1.msra.mxu0 0.0
      %840 = vmatprep.subr.mxu0 0.0
      %841 = vmatpush1.msra.mxu0 0.0
      %842 = vmatprep.subr.mxu0 0.0
      %843 = vmatpush1.msra.mxu0 0.0
      %844 = vmatprep.subr.mxu0 0.0
      %845 = vmatpush1.msra.mxu0 0.0
      %846 = vmatprep.subr.mxu0 0.0
      %847 = vmatpush1.msra.mxu0 0.0
      %848 = vmatprep.subr.mxu0 0.0
      %849 = vmatpush1.msra.mxu0 0.0
      %850 = vmatprep.subr.mxu0 0.0
      %851 = vmatpush1.msra.mxu0 0.0
      %852 = vmatprep.subr.mxu0 0.0
      %853 = vmatpush1.msra.mxu0 0.0
      %854 = vmatprep.subr.mxu0 0.0
      %855 = vmatpush1.msra.mxu0 0.0
      %856 = vmatprep.subr.mxu0 0.0
      %857 = vmatpush1.msra.mxu0 0.0
      %858 = vmatprep.subr.mxu0 0.0
      %859 = vmatpush1.msra.mxu0 0.0
      %860 = vmatprep.subr.mxu0 0.0
      %861 = vmatpush1.msra.mxu0 0.0
      %862 = vmatprep.subr.mxu0 0.0
      %863 = vmatpush1.msra.mxu0 0.0
      %864 = vmatprep.subr.mxu0 0.0
      %865 = vmatpush1.msra.mxu0 0.0
      %866 = vmatprep.subr.mxu0 0.0
      %867 = vmatpush1.msra.mxu0 0.0
      %868 = vmatprep.subr.mxu0 0.0
      %869 = vmatpush1.msra.mxu0 0.0
      %870 = vmatprep.subr.mxu0 0.0
      %871 = vmatpush1.msra.mxu0 0.0
      %872 = vmatprep.subr.mxu0 0.0
      %873 = vmatpush1.msra.mxu0 0.0
      %874 = vmatprep.subr.mxu0 0.0
      %875 = vmatpush1.msra.mxu0 0.0
      %876 = vmatprep.subr.mxu0 0.0
      %877 = vmatpush1.msra.mxu0 0.0
      %878 = vmatprep.subr.mxu0 0.0
      %879 = vmatpush1.msra.mxu0 0.0
      %880 = vmatprep.mubr.f32.mxu0 0.0
      %v881 = vand.u32 %v381, 4294901760
      %882 = vmatmul.mubr.f32.gmra.mrb[0].mxu0 %v881
      %v883 = vpop.f32.mrb[0].mxu0
      %v884 = vadd.f32 %v779, %v883
      %v885 = vpop.f32.mrb[0].mxu0
      %v886 = vadd.f32 %v781, %v885
      %887 = vmatprep.mubr.f32.mxu0 0.0
      %v888 = vand.u32 %v384, 4294901760
      %889 = vmatmul.mubr.f32.gmra.mrb[0].mxu0 %v888
      %v890 = vpop.f32.mrb[0].mxu0
      %v891 = vadd.f32 %v788, %v890
      %v892 = vpop.f32.mrb[0].mxu0
      %v893 = vadd.f32 %v790, %v892
      %894 = vmatprep.mubr.f32.mxu0 0.0
      %v895 = vand.u32 %v387, 4294901760
      %896 = vmatmul.mubr.f32.gmra.mrb[0].mxu0 %v895
      %v897 = vpop.f32.mrb[0].mxu0
      %v898 = vadd.f32 %v797, %v897
      %v899 = vpop.f32.mrb[0].mxu0
      %v900 = vadd.f32 %v799, %v899
      %901 = vmatprep.mubr.f32.mxu0 0.0
      %v902 = vand.u32 %v390, 4294901760
      %903 = vmatmul.mubr.f32.gmra.mrb[0].mxu0 %v902
      %v904 = vpop.f32.mrb[0].mxu0
      %v905 = vadd.f32 %v806, %v904
      %v906 = vpop.f32.mrb[0].mxu0
      %v907 = vadd.f32 %v808, %v906
      %908 = vdwg.mxu0
      %v909 = vand.u32 %v354, 4294901760
      %910 = vmatprep.subr.mxu0 %v909
      %v911 = vand.u32 %v353, 4294901760
      %912 = vmatpush1.msra.mxu0 %v911
      %913 = vmatprep.subr.mxu0 0.0
      %914 = vmatpush1.msra.mxu0 0.0
      %915 = vmatprep.subr.mxu0 0.0
      %916 = vmatpush1.msra.mxu0 0.0
      %917 = vmatprep.subr.mxu0 0.0
      %918 = vmatpush1.msra.mxu0 0.0
      %919 = vmatprep.subr.mxu0 0.0
      %920 = vmatpush1.msra.mxu0 0.0
      %921 = vmatprep.subr.mxu0 0.0
      %922 = vmatpush1.msra.mxu0 0.0
      %923 = vmatprep.subr.mxu0 0.0
      %924 = vmatpush1.msra.mxu0 0.0
      %925 = vmatprep.subr.mxu0 0.0
      %926 = vmatpush1.msra.mxu0 0.0
      %927 = vmatprep.subr.mxu0 0.0
      %928 = vmatpush1.msra.mxu0 0.0
      %929 = vmatprep.subr.mxu0 0.0
      %930 = vmatpush1.msra.mxu0 0.0
      %931 = vmatprep.subr.mxu0 0.0
      %932 = vmatpush1.msra.mxu0 0.0
      %933 = vmatprep.subr.mxu0 0.0
      %934 = vmatpush1.msra.mxu0 0.0
      %935 = vmatprep.subr.mxu0 0.0
      %936 = vmatpush1.msra.mxu0 0.0
      %937 = vmatprep.subr.mxu0 0.0
      %938 = vmatpush1.msra.mxu0 0.0
      %939 = vmatprep.subr.mxu0 0.0
      %940 = vmatpush1.msra.mxu0 0.0
      %941 = vmatprep.subr.mxu0 0.0
      %942 = vmatpush1.msra.mxu0 0.0
      %943 = vmatprep.subr.mxu0 0.0
      %944 = vmatpush1.msra.mxu0 0.0
      %945 = vmatprep.subr.mxu0 0.0
      %946 = vmatpush1.msra.mxu0 0.0
      %947 = vmatprep.subr.mxu0 0.0
      %948 = vmatpush1.msra.mxu0 0.0
      %949 = vmatprep.subr.mxu0 0.0
      %950 = vmatpush1.msra.mxu0 0.0
      %951 = vmatprep.subr.mxu0 0.0
      %952 = vmatpush1.msra.mxu0 0.0
      %953 = vmatprep.subr.mxu0 0.0
      %954 = vmatpush1.msra.mxu0 0.0
      %955 = vmatprep.subr.mxu0 0.0
      %956 = vmatpush1.msra.mxu0 0.0
      %957 = vmatprep.subr.mxu0 0.0
      %958 = vmatpush1.msra.mxu0 0.0
      %959 = vmatprep.subr.mxu0 0.0
      %960 = vmatpush1.msra.mxu0 0.0
      %961 = vmatprep.subr.mxu0 0.0
      %962 = vmatpush1.msra.mxu0 0.0
      %963 = vmatprep.subr.mxu0 0.0
      %964 = vmatpush1.msra.mxu0 0.0
      %965 = vmatprep.subr.mxu0 0.0
      %966 = vmatpush1.msra.mxu0 0.0
      %967 = vmatprep.subr.mxu0 0.0
      %968 = vmatpush1.msra.mxu0 0.0
      %969 = vmatprep.subr.mxu0 0.0
      %970 = vmatpush1.msra.mxu0 0.0
      %971 = vmatprep.subr.mxu0 0.0
      %972 = vmatpush1.msra.mxu0 0.0
      %973 = vmatprep.subr.mxu0 0.0
      %974 = vmatpush1.msra.mxu0 0.0
      %975 = vmatprep.mubr.f32.mxu0 0.0
      %v976 = vand.u32 %v381, 4294901760
      %977 = vmatmul.mubr.f32.gmra.mrb[0].mxu0 %v976
      %v978 = vpop.f32.mrb[0].mxu0
      %v979 = vadd.f32 %v884, %v978
      %v980 = vpop.f32.mrb[0].mxu0
      %v981 = vadd.f32 %v886, %v980
      %982 = vmatprep.mubr.f32.mxu0 0.0
      %v983 = vand.u32 %v384, 4294901760
      %984 = vmatmul.mubr.f32.gmra.mrb[0].mxu0 %v983
      %v985 = vpop.f32.mrb[0].mxu0
      %v986 = vadd.f32 %v891, %v985
      %v987 = vpop.f32.mrb[0].mxu0
      %v988 = vadd.f32 %v893, %v987
      %989 = vmatprep.mubr.f32.mxu0 0.0
      %v990 = vand.u32 %v387, 4294901760
      %991 = vmatmul.mubr.f32.gmra.mrb[0].mxu0 %v990
      %v992 = vpop.f32.mrb[0].mxu0
      %v993 = vadd.f32 %v898, %v992
      %v994 = vpop.f32.mrb[0].mxu0
      %v995 = vadd.f32 %v900, %v994
      %996 = vmatprep.mubr.f32.mxu0 0.0
      %v997 = vand.u32 %v390, 4294901760
      %998 = vmatmul.mubr.f32.gmra.mrb[0].mxu0 %v997
      %v999 = vpop.f32.mrb[0].mxu0
      %v1000 = vadd.f32 %v905, %v999
      %v1001 = vpop.f32.mrb[0].mxu0
      %v1002 = vadd.f32 %v907, %v1001
      %1003 = vdwg.mxu0
      %v1004 = vmul.f32 %v979, 0.2
      %v1005 = vmul.f32 %v981, 0.2
      %v1006 = vmul.f32 %v986, 0.2
      %v1007 = vmul.f32 %v988, 0.2
      %v1008 = vmul.f32 %v993, 0.2
      %v1009 = vmul.f32 %v995, 0.2
      %v1010 = vmul.f32 %v1000, 0.2
      %v1011 = vmul.f32 %v1002, 0.2
      %v1012 = vmax.f32 %v979, %v1004
      %v1013 = vmax.f32 %v981, %v1005
      %v1014 = vmax.f32 %v986, %v1006
      %v1015 = vmax.f32 %v988, %v1007
      %v1016 = vmax.f32 %v993, %v1008
      %v1017 = vmax.f32 %v995, %v1009
      %v1018 = vmax.f32 %v1000, %v1010
      %v1019 = vmax.f32 %v1002, %v1011
      %v1020 = vld [vmem:[%s4] sm:$0xff]
      %v1021 = vld [vmem:[%s4 + $0x8] sm:$0xff]
      %v1022 = vld [vmem:[%s4 + $0x10] sm:$0xff]
      %v1023 = vld [vmem:[%s4 + $0x18] sm:$0xff]
      %v1024 = vld [vmem:[%s5] sm:$0xff]
      %v1025 = vld [vmem:[%s5 + $0x8] sm:$0xff]
      %v1026 = vld [vmem:[%s5 + $0x10] sm:$0xff]
      %v1027 = vld [vmem:[%s5 + $0x18] sm:$0xff]
      %1029 = vset.pattern.permute.xlu0 0
      %1030 = vperm.xlu0 %1029, %v1024
      %v1031 = vpop.permute.xlu0 %1030
      %1034 = vset.pattern.permute.xlu0 0
      %1035 = vperm.xlu0 %1034, %v1025
      %v1036 = vpop.permute.xlu0 %1035
      %1039 = vset.pattern.permute.xlu0 0
      %1040 = vperm.xlu0 %1039, %v1026
      %v1041 = vpop.permute.xlu0 %1040
      %1044 = vset.pattern.permute.xlu0 0
      %1045 = vperm.xlu0 %1044, %v1027
      %v1046 = vpop.permute.xlu0 %1045
      %vm1048 = vcmask 261120
      %v1050 = vsel %vm1048, %v1020, 0
      %v1053 = vsel %vm1048, %v1021, 0
      %v1056 = vsel %vm1048, %v1022, 0
      %v1059 = vsel %vm1048, %v1023, 0
      %v1061 = vand.u32 %v1013, 4294901760
      %1062 = vmatprep.subr.mxu0 %v1061
      %v1063 = vand.u32 %v1012, 4294901760
      %1064 = vmatpush1.msra.mxu0 %v1063
      %v1065 = vand.u32 %v1015, 4294901760
      %1066 = vmatprep.subr.mxu0 %v1065
      %v1067 = vand.u32 %v1014, 4294901760
      %1068 = vmatpush1.msra.mxu0 %v1067
      %v1069 = vand.u32 %v1017, 4294901760
      %1070 = vmatprep.subr.mxu0 %v1069
      %v1071 = vand.u32 %v1016, 4294901760
      %1072 = vmatpush1.msra.mxu0 %v1071
      %v1073 = vand.u32 %v1019, 4294901760
      %1074 = vmatprep.subr.mxu0 %v1073
      %v1075 = vand.u32 %v1018, 4294901760
      %1076 = vmatpush1.msra.mxu0 %v1075
      %1077 = vmatprep.subr.mxu0 0.0
      %1078 = vmatpush1.msra.mxu0 0.0
      %1079 = vmatprep.subr.mxu0 0.0
      %1080 = vmatpush1.msra.mxu0 0.0
      %1081 = vmatprep.subr.mxu0 0.0
      %1082 = vmatpush1.msra.mxu0 0.0
      %1083 = vmatprep.subr.mxu0 0.0
      %1084 = vmatpush1.msra.mxu0 0.0
      %1085 = vmatprep.subr.mxu0 0.0
      %1086 = vmatpush1.msra.mxu0 0.0
      %1087 = vmatprep.subr.mxu0 0.0
      %1088 = vmatpush1.msra.mxu0 0.0
      %1089 = vmatprep.subr.mxu0 0.0
      %1090 = vmatpush1.msra.mxu0 0.0
      %1091 = vmatprep.subr.mxu0 0.0
      %1092 = vmatpush1.msra.mxu0 0.0
      %1093 = vmatprep.subr.mxu0 0.0
      %1094 = vmatpush1.msra.mxu0 0.0
      %1095 = vmatprep.subr.mxu0 0.0
      %1096 = vmatpush1.msra.mxu0 0.0
      %1097 = vmatprep.subr.mxu0 0.0
      %1098 = vmatpush1.msra.mxu0 0.0
      %1099 = vmatprep.subr.mxu0 0.0
      %1100 = vmatpush1.msra.mxu0 0.0
      %1101 = vmatprep.subr.mxu0 0.0
      %1102 = vmatpush1.msra.mxu0 0.0
      %1103 = vmatprep.subr.mxu0 0.0
      %1104 = vmatpush1.msra.mxu0 0.0
      %1105 = vmatprep.subr.mxu0 0.0
      %1106 = vmatpush1.msra.mxu0 0.0
      %1107 = vmatprep.subr.mxu0 0.0
      %1108 = vmatpush1.msra.mxu0 0.0
      %1109 = vmatprep.subr.mxu0 0.0
      %1110 = vmatpush1.msra.mxu0 0.0
      %1111 = vmatprep.subr.mxu0 0.0
      %1112 = vmatpush1.msra.mxu0 0.0
      %1113 = vmatprep.subr.mxu0 0.0
      %1114 = vmatpush1.msra.mxu0 0.0
      %1115 = vmatprep.subr.mxu0 0.0
      %1116 = vmatpush1.msra.mxu0 0.0
      %1117 = vmatprep.subr.mxu0 0.0
      %1118 = vmatpush1.msra.mxu0 0.0
      %1119 = vmatprep.subr.mxu0 0.0
      %1120 = vmatpush1.msra.mxu0 0.0
      %1121 = vmatprep.subr.mxu0 0.0
      %1122 = vmatpush1.msra.mxu0 0.0
      %1123 = vmatprep.subr.mxu0 0.0
      %1124 = vmatpush1.msra.mxu0 0.0
      %1125 = vmatprep.subr.mxu0 0.0
      %1126 = vmatpush1.msra.mxu0 0.0
      %1127 = vmatprep.subr.mxu0 0.0
      %1128 = vmatpush1.msra.mxu0 0.0
      %1129 = vmatprep.subr.mxu0 0.0
      %1130 = vmatpush1.msra.mxu0 0.0
      %1131 = vmatprep.subr.mxu0 0.0
      %1132 = vmatpush1.msra.mxu0 0.0
      %1133 = vmatprep.mubr.f32.mxu0 0.0
      %v1134 = vand.u32 %v1050, 4294901760
      %v1135 = vsub.f32 %v1050, %v1134
      %v1136 = vand.u32 %v1135, 4294901760
      %v1137 = vsub.f32 %v1135, %v1136
      %v1138 = vand.u32 %v1137, 4294901760
      %1139 = vmatmul.mubr.f32.gmra.mrb[0].mxu0 %v1138
      %v1140 = vpop.f32.mrb[0].mxu0
      %v1141 = vadd.f32 %v1031, %v1140
      %v1142 = vpop.f32.mrb[0].mxu0
      %v1143 = vadd.f32 %v1031, %v1142
      %1144 = vmatprep.mubr.f32.mxu0 0.0
      %v1145 = vand.u32 %v1053, 4294901760
      %v1146 = vsub.f32 %v1053, %v1145
      %v1147 = vand.u32 %v1146, 4294901760
      %v1148 = vsub.f32 %v1146, %v1147
      %v1149 = vand.u32 %v1148, 4294901760
      %1150 = vmatmul.mubr.f32.gmra.mrb[0].mxu0 %v1149
      %v1151 = vpop.f32.mrb[0].mxu0
      %v1152 = vadd.f32 %v1036, %v1151
      %v1153 = vpop.f32.mrb[0].mxu0
      %v1154 = vadd.f32 %v1036, %v1153
      %1155 = vmatprep.mubr.f32.mxu0 0.0
      %v1156 = vand.u32 %v1056, 4294901760
      %v1157 = vsub.f32 %v1056, %v1156
      %v1158 = vand.u32 %v1157, 4294901760
      %v1159 = vsub.f32 %v1157, %v1158
      %v1160 = vand.u32 %v1159, 4294901760
      %1161 = vmatmul.mubr.f32.gmra.mrb[0].mxu0 %v1160
      %v1162 = vpop.f32.mrb[0].mxu0
      %v1163 = vadd.f32 %v1041, %v1162
      %v1164 = vpop.f32.mrb[0].mxu0
      %v1165 = vadd.f32 %v1041, %v1164
      %1166 = vmatprep.mubr.f32.mxu0 0.0
      %v1167 = vand.u32 %v1059, 4294901760
      %v1168 = vsub.f32 %v1059, %v1167
      %v1169 = vand.u32 %v1168, 4294901760
      %v1170 = vsub.f32 %v1168, %v1169
      %v1171 = vand.u32 %v1170, 4294901760
      %1172 = vmatmul.mubr.f32.gmra.mrb[0].mxu0 %v1171
      %v1173 = vpop.f32.mrb[0].mxu0
      %v1174 = vadd.f32 %v1046, %v1173
      %v1175 = vpop.f32.mrb[0].mxu0
      %v1176 = vadd.f32 %v1046, %v1175
      %1177 = vdwg.mxu0
      %v1178 = vand.u32 %v1013, 4294901760
      %v1179 = vsub.f32 %v1013, %v1178
      %v1180 = vand.u32 %v1179, 4294901760
      %v1181 = vsub.f32 %v1179, %v1180
      %v1182 = vand.u32 %v1181, 4294901760
      %1183 = vmatprep.subr.mxu0 %v1182
      %v1184 = vand.u32 %v1012, 4294901760
      %v1185 = vsub.f32 %v1012, %v1184
      %v1186 = vand.u32 %v1185, 4294901760
      %v1187 = vsub.f32 %v1185, %v1186
      %v1188 = vand.u32 %v1187, 4294901760
      %1189 = vmatpush1.msra.mxu0 %v1188
      %v1190 = vand.u32 %v1015, 4294901760
      %v1191 = vsub.f32 %v1015, %v1190
      %v1192 = vand.u32 %v1191, 4294901760
      %v1193 = vsub.f32 %v1191, %v1192
      %v1194 = vand.u32 %v1193, 4294901760
      %1195 = vmatprep.subr.mxu0 %v1194
      %v1196 = vand.u32 %v1014, 4294901760
      %v1197 = vsub.f32 %v1014, %v1196
      %v1198 = vand.u32 %v1197, 4294901760
      %v1199 = vsub.f32 %v1197, %v1198
      %v1200 = vand.u32 %v1199, 4294901760
      %1201 = vmatpush1.msra.mxu0 %v1200
      %v1202 = vand.u32 %v1017, 4294901760
      %v1203 = vsub.f32 %v1017, %v1202
      %v1204 = vand.u32 %v1203, 4294901760
      %v1205 = vsub.f32 %v1203, %v1204
      %v1206 = vand.u32 %v1205, 4294901760
      %1207 = vmatprep.subr.mxu0 %v1206
      %v1208 = vand.u32 %v1016, 4294901760
      %v1209 = vsub.f32 %v1016, %v1208
      %v1210 = vand.u32 %v1209, 4294901760
      %v1211 = vsub.f32 %v1209, %v1210
      %v1212 = vand.u32 %v1211, 4294901760
      %1213 = vmatpush1.msra.mxu0 %v1212
      %v1214 = vand.u32 %v1019, 4294901760
      %v1215 = vsub.f32 %v1019, %v1214
      %v1216 = vand.u32 %v1215, 4294901760
      %v1217 = vsub.f32 %v1215, %v1216
      %v1218 = vand.u32 %v1217, 4294901760
      %1219 = vmatprep.subr.mxu0 %v1218
      %v1220 = vand.u32 %v1018, 4294901760
      %v1221 = vsub.f32 %v1018, %v1220
      %v1222 = vand.u32 %v1221, 4294901760
      %v1223 = vsub.f32 %v1221, %v1222
      %v1224 = vand.u32 %v1223, 4294901760
      %1225 = vmatpush1.msra.mxu0 %v1224
      %1226 = vmatprep.subr.mxu0 0.0
      %1227 = vmatpush1.msra.mxu0 0.0
      %1228 = vmatprep.subr.mxu0 0.0
      %1229 = vmatpush1.msra.mxu0 0.0
      %1230 = vmatprep.subr.mxu0 0.0
      %1231 = vmatpush1.msra.mxu0 0.0
      %1232 = vmatprep.subr.mxu0 0.0
      %1233 = vmatpush1.msra.mxu0 0.0
      %1234 = vmatprep.subr.mxu0 0.0
      %1235 = vmatpush1.msra.mxu0 0.0
      %1236 = vmatprep.subr.mxu0 0.0
      %1237 = vmatpush1.msra.mxu0 0.0
      %1238 = vmatprep.subr.mxu0 0.0
      %1239 = vmatpush1.msra.mxu0 0.0
      %1240 = vmatprep.subr.mxu0 0.0
      %1241 = vmatpush1.msra.mxu0 0.0
      %1242 = vmatprep.subr.mxu0 0.0
      %1243 = vmatpush1.msra.mxu0 0.0
      %1244 = vmatprep.subr.mxu0 0.0
      %1245 = vmatpush1.msra.mxu0 0.0
      %1246 = vmatprep.subr.mxu0 0.0
      %1247 = vmatpush1.msra.mxu0 0.0
      %1248 = vmatprep.subr.mxu0 0.0
      %1249 = vmatpush1.msra.mxu0 0.0
      %1250 = vmatprep.subr.mxu0 0.0
      %1251 = vmatpush1.msra.mxu0 0.0
      %1252 = vmatprep.subr.mxu0 0.0
      %1253 = vmatpush1.msra.mxu0 0.0
      %1254 = vmatprep.subr.mxu0 0.0
      %1255 = vmatpush1.msra.mxu0 0.0
      %1256 = vmatprep.subr.mxu0 0.0
      %1257 = vmatpush1.msra.mxu0 0.0
      %1258 = vmatprep.subr.mxu0 0.0
      %1259 = vmatpush1.msra.mxu0 0.0
      %1260 = vmatprep.subr.mxu0 0.0
      %1261 = vmatpush1.msra.mxu0 0.0
      %1262 = vmatprep.subr.mxu0 0.0
      %1263 = vmatpush1.msra.mxu0 0.0
      %1264 = vmatprep.subr.mxu0 0.0
      %1265 = vmatpush1.msra.mxu0 0.0
      %1266 = vmatprep.subr.mxu0 0.0
      %1267 = vmatpush1.msra.mxu0 0.0
      %1268 = vmatprep.subr.mxu0 0.0
      %1269 = vmatpush1.msra.mxu0 0.0
      %1270 = vmatprep.subr.mxu0 0.0
      %1271 = vmatpush1.msra.mxu0 0.0
      %1272 = vmatprep.subr.mxu0 0.0
      %1273 = vmatpush1.msra.mxu0 0.0
      %1274 = vmatprep.subr.mxu0 0.0
      %1275 = vmatpush1.msra.mxu0 0.0
      %1276 = vmatprep.subr.mxu0 0.0
      %1277 = vmatpush1.msra.mxu0 0.0
      %1278 = vmatprep.subr.mxu0 0.0
      %1279 = vmatpush1.msra.mxu0 0.0
      %1280 = vmatprep.subr.mxu0 0.0
      %1281 = vmatpush1.msra.mxu0 0.0
      %1282 = vmatprep.mubr.f32.mxu0 0.0
      %v1283 = vand.u32 %v1050, 4294901760
      %1284 = vmatmul.mubr.f32.gmra.mrb[0].mxu0 %v1283
      %v1285 = vpop.f32.mrb[0].mxu0
      %v1286 = vadd.f32 %v1141, %v1285
      %v1287 = vpop.f32.mrb[0].mxu0
      %v1288 = vadd.f32 %v1143, %v1287
      %1289 = vmatprep.mubr.f32.mxu0 0.0
      %v1290 = vand.u32 %v1053, 4294901760
      %1291 = vmatmul.mubr.f32.gmra.mrb[0].mxu0 %v1290
      %v1292 = vpop.f32.mrb[0].mxu0
      %v1293 = vadd.f32 %v1152, %v1292
      %v1294 = vpop.f32.mrb[0].mxu0
      %v1295 = vadd.f32 %v1154, %v1294
      %1296 = vmatprep.mubr.f32.mxu0 0.0
      %v1297 = vand.u32 %v1056, 4294901760
      %1298 = vmatmul.mubr.f32.gmra.mrb[0].mxu0 %v1297
      %v1299 = vpop.f32.mrb[0].mxu0
      %v1300 = vadd.f32 %v1163, %v1299
      %v1301 = vpop.f32.mrb[0].mxu0
      %v1302 = vadd.f32 %v1165, %v1301
      %1303 = vmatprep.mubr.f32.mxu0 0.0
      %v1304 = vand.u32 %v1059, 4294901760
      %1305 = vmatmul.mubr.f32.gmra.mrb[0].mxu0 %v1304
      %v1306 = vpop.f32.mrb[0].mxu0
      %v1307 = vadd.f32 %v1174, %v1306
      %v1308 = vpop.f32.mrb[0].mxu0
      %v1309 = vadd.f32 %v1176, %v1308
      %1310 = vdwg.mxu0
      %v1311 = vand.u32 %v1013, 4294901760
      %v1312 = vsub.f32 %v1013, %v1311
      %1313 = vmatprep.subr.mxu0 %v1312
      %v1314 = vand.u32 %v1012, 4294901760
      %v1315 = vsub.f32 %v1012, %v1314
      %1316 = vmatpush1.msra.mxu0 %v1315
      %v1317 = vand.u32 %v1015, 4294901760
      %v1318 = vsub.f32 %v1015, %v1317
      %1319 = vmatprep.subr.mxu0 %v1318
      %v1320 = vand.u32 %v1014, 4294901760
      %v1321 = vsub.f32 %v1014, %v1320
      %1322 = vmatpush1.msra.mxu0 %v1321
      %v1323 = vand.u32 %v1017, 4294901760
      %v1324 = vsub.f32 %v1017, %v1323
      %1325 = vmatprep.subr.mxu0 %v1324
      %v1326 = vand.u32 %v1016, 4294901760
      %v1327 = vsub.f32 %v1016, %v1326
      %1328 = vmatpush1.msra.mxu0 %v1327
      %v1329 = vand.u32 %v1019, 4294901760
      %v1330 = vsub.f32 %v1019, %v1329
      %1331 = vmatprep.subr.mxu0 %v1330
      %v1332 = vand.u32 %v1018, 4294901760
      %v1333 = vsub.f32 %v1018, %v1332
      %1334 = vmatpush1.msra.mxu0 %v1333
      %1335 = vmatprep.subr.mxu0 0.0
      %1336 = vmatpush1.msra.mxu0 0.0
      %1337 = vmatprep.subr.mxu0 0.0
      %1338 = vmatpush1.msra.mxu0 0.0
      %1339 = vmatprep.subr.mxu0 0.0
      %1340 = vmatpush1.msra.mxu0 0.0
      %1341 = vmatprep.subr.mxu0 0.0
      %1342 = vmatpush1.msra.mxu0 0.0
      %1343 = vmatprep.subr.mxu0 0.0
      %1344 = vmatpush1.msra.mxu0 0.0
      %1345 = vmatprep.subr.mxu0 0.0
      %1346 = vmatpush1.msra.mxu0 0.0
      %1347 = vmatprep.subr.mxu0 0.0
      %1348 = vmatpush1.msra.mxu0 0.0
      %1349 = vmatprep.subr.mxu0 0.0
      %1350 = vmatpush1.msra.mxu0 0.0
      %1351 = vmatprep.subr.mxu0 0.0
      %1352 = vmatpush1.msra.mxu0 0.0
      %1353 = vmatprep.subr.mxu0 0.0
      %1354 = vmatpush1.msra.mxu0 0.0
      %1355 = vmatprep.subr.mxu0 0.0
      %1356 = vmatpush1.msra.mxu0 0.0
      %1357 = vmatprep.subr.mxu0 0.0
      %1358 = vmatpush1.msra.mxu0 0.0
      %1359 = vmatprep.subr.mxu0 0.0
      %1360 = vmatpush1.msra.mxu0 0.0
      %1361 = vmatprep.subr.mxu0 0.0
      %1362 = vmatpush1.msra.mxu0 0.0
      %1363 = vmatprep.subr.mxu0 0.0
      %1364 = vmatpush1.msra.mxu0 0.0
      %1365 = vmatprep.subr.mxu0 0.0
      %1366 = vmatpush1.msra.mxu0 0.0
      %1367 = vmatprep.subr.mxu0 0.0
      %1368 = vmatpush1.msra.mxu0 0.0
      %1369 = vmatprep.subr.mxu0 0.0
      %1370 = vmatpush1.msra.mxu0 0.0
      %1371 = vmatprep.subr.mxu0 0.0
      %1372 = vmatpush1.msra.mxu0 0.0
      %1373 = vmatprep.subr.mxu0 0.0
      %1374 = vmatpush1.msra.mxu0 0.0
      %1375 = vmatprep.subr.mxu0 0.0
      %1376 = vmatpush1.msra.mxu0 0.0
      %1377 = vmatprep.subr.mxu0 0.0
      %1378 = vmatpush1.msra.mxu0 0.0
      %1379 = vmatprep.subr.mxu0 0.0
      %1380 = vmatpush1.msra.mxu0 0.0
      %1381 = vmatprep.subr.mxu0 0.0
      %1382 = vmatpush1.msra.mxu0 0.0
      %1383 = vmatprep.subr.mxu0 0.0
      %1384 = vmatpush1.msra.mxu0 0.0
      %1385 = vmatprep.subr.mxu0 0.0
      %1386 = vmatpush1.msra.mxu0 0.0
      %1387 = vmatprep.subr.mxu0 0.0
      %1388 = vmatpush1.msra.mxu0 0.0
      %1389 = vmatprep.subr.mxu0 0.0
      %1390 = vmatpush1.msra.mxu0 0.0
      %1391 = vmatprep.mubr.f32.mxu0 0.0
      %v1392 = vand.u32 %v1050, 4294901760
      %v1393 = vsub.f32 %v1050, %v1392
      %1394 = vmatmul.mubr.f32.gmra.mrb[0].mxu0 %v1393
      %v1395 = vpop.f32.mrb[0].mxu0
      %v1396 = vadd.f32 %v1286, %v1395
      %v1397 = vpop.f32.mrb[0].mxu0
      %v1398 = vadd.f32 %v1288, %v1397
      %1399 = vmatprep.mubr.f32.mxu0 0.0
      %v1400 = vand.u32 %v1053, 4294901760
      %v1401 = vsub.f32 %v1053, %v1400
      %1402 = vmatmul.mubr.f32.gmra.mrb[0].mxu0 %v1401
      %v1403 = vpop.f32.mrb[0].mxu0
      %v1404 = vadd.f32 %v1293, %v1403
      %v1405 = vpop.f32.mrb[0].mxu0
      %v1406 = vadd.f32 %v1295, %v1405
      %1407 = vmatprep.mubr.f32.mxu0 0.0
      %v1408 = vand.u32 %v1056, 4294901760
      %v1409 = vsub.f32 %v1056, %v1408
      %1410 = vmatmul.mubr.f32.gmra.mrb[0].mxu0 %v1409
      %v1411 = vpop.f32.mrb[0].mxu0
      %v1412 = vadd.f32 %v1300, %v1411
      %v1413 = vpop.f32.mrb[0].mxu0
      %v1414 = vadd.f32 %v1302, %v1413
      %1415 = vmatprep.mubr.f32.mxu0 0.0
      %v1416 = vand.u32 %v1059, 4294901760
      %v1417 = vsub.f32 %v1059, %v1416
      %1418 = vmatmul.mubr.f32.gmra.mrb[0].mxu0 %v1417
      %v1419 = vpop.f32.mrb[0].mxu0
      %v1420 = vadd.f32 %v1307, %v1419
      %v1421 = vpop.f32.mrb[0].mxu0
      %v1422 = vadd.f32 %v1309, %v1421
      %1423 = vdwg.mxu0
      %v1424 = vand.u32 %v1013, 4294901760
      %1425 = vmatprep.subr.mxu0 %v1424
      %v1426 = vand.u32 %v1012, 4294901760
      %1427 = vmatpush1.msra.mxu0 %v1426
      %v1428 = vand.u32 %v1015, 4294901760
      %1429 = vmatprep.subr.mxu0 %v1428
      %v1430 = vand.u32 %v1014, 4294901760
      %1431 = vmatpush1.msra.mxu0 %v1430
      %v1432 = vand.u32 %v1017, 4294901760
      %1433 = vmatprep.subr.mxu0 %v1432
      %v1434 = vand.u32 %v1016, 4294901760
      %1435 = vmatpush1.msra.mxu0 %v1434
      %v1436 = vand.u32 %v1019, 4294901760
      %1437 = vmatprep.subr.mxu0 %v1436
      %v1438 = vand.u32 %v1018, 4294901760
      %1439 = vmatpush1.msra.mxu0 %v1438
      %1440 = vmatprep.subr.mxu0 0.0
      %1441 = vmatpush1.msra.mxu0 0.0
      %1442 = vmatprep.subr.mxu0 0.0
      %1443 = vmatpush1.msra.mxu0 0.0
      %1444 = vmatprep.subr.mxu0 0.0
      %1445 = vmatpush1.msra.mxu0 0.0
      %1446 = vmatprep.subr.mxu0 0.0
      %1447 = vmatpush1.msra.mxu0 0.0
      %1448 = vmatprep.subr.mxu0 0.0
      %1449 = vmatpush1.msra.mxu0 0.0
      %1450 = vmatprep.subr.mxu0 0.0
      %1451 = vmatpush1.msra.mxu0 0.0
      %1452 = vmatprep.subr.mxu0 0.0
      %1453 = vmatpush1.msra.mxu0 0.0
      %1454 = vmatprep.subr.mxu0 0.0
      %1455 = vmatpush1.msra.mxu0 0.0
      %1456 = vmatprep.subr.mxu0 0.0
      %1457 = vmatpush1.msra.mxu0 0.0
      %1458 = vmatprep.subr.mxu0 0.0
      %1459 = vmatpush1.msra.mxu0 0.0
      %1460 = vmatprep.subr.mxu0 0.0
      %1461 = vmatpush1.msra.mxu0 0.0
      %1462 = vmatprep.subr.mxu0 0.0
      %1463 = vmatpush1.msra.mxu0 0.0
      %1464 = vmatprep.subr.mxu0 0.0
      %1465 = vmatpush1.msra.mxu0 0.0
      %1466 = vmatprep.subr.mxu0 0.0
      %1467 = vmatpush1.msra.mxu0 0.0
      %1468 = vmatprep.subr.mxu0 0.0
      %1469 = vmatpush1.msra.mxu0 0.0
      %1470 = vmatprep.subr.mxu0 0.0
      %1471 = vmatpush1.msra.mxu0 0.0
      %1472 = vmatprep.subr.mxu0 0.0
      %1473 = vmatpush1.msra.mxu0 0.0
      %1474 = vmatprep.subr.mxu0 0.0
      %1475 = vmatpush1.msra.mxu0 0.0
      %1476 = vmatprep.subr.mxu0 0.0
      %1477 = vmatpush1.msra.mxu0 0.0
      %1478 = vmatprep.subr.mxu0 0.0
      %1479 = vmatpush1.msra.mxu0 0.0
      %1480 = vmatprep.subr.mxu0 0.0
      %1481 = vmatpush1.msra.mxu0 0.0
      %1482 = vmatprep.subr.mxu0 0.0
      %1483 = vmatpush1.msra.mxu0 0.0
      %1484 = vmatprep.subr.mxu0 0.0
      %1485 = vmatpush1.msra.mxu0 0.0
      %1486 = vmatprep.subr.mxu0 0.0
      %1487 = vmatpush1.msra.mxu0 0.0
      %1488 = vmatprep.subr.mxu0 0.0
      %1489 = vmatpush1.msra.mxu0 0.0
      %1490 = vmatprep.subr.mxu0 0.0
      %1491 = vmatpush1.msra.mxu0 0.0
      %1492 = vmatprep.subr.mxu0 0.0
      %1493 = vmatpush1.msra.mxu0 0.0
      %1494 = vmatprep.subr.mxu0 0.0
      %1495 = vmatpush1.msra.mxu0 0.0
      %1496 = vmatprep.mubr.f32.mxu0 0.0
      %v1497 = vand.u32 %v1050, 4294901760
      %v1498 = vsub.f32 %v1050, %v1497
      %v1499 = vand.u32 %v1498, 4294901760
      %1500 = vmatmul.mubr.f32.gmra.mrb[0].mxu0 %v1499
      %v1501 = vpop.f32.mrb[0].mxu0
      %v1502 = vadd.f32 %v1396, %v1501
      %v1503 = vpop.f32.mrb[0].mxu0
      %v1504 = vadd.f32 %v1398, %v1503
      %1505 = vmatprep.mubr.f32.mxu0 0.0
      %v1506 = vand.u32 %v1053, 4294901760
      %v1507 = vsub.f32 %v1053, %v1506
      %v1508 = vand.u32 %v1507, 4294901760
      %1509 = vmatmul.mubr.f32.gmra.mrb[0].mxu0 %v1508
      %v1510 = vpop.f32.mrb[0].mxu0
      %v1511 = vadd.f32 %v1404, %v1510
      %v1512 = vpop.f32.mrb[0].mxu0
      %v1513 = vadd.f32 %v1406, %v1512
      %1514 = vmatprep.mubr.f32.mxu0 0.0
      %v1515 = vand.u32 %v1056, 4294901760
      %v1516 = vsub.f32 %v1056, %v1515
      %v1517 = vand.u32 %v1516, 4294901760
      %1518 = vmatmul.mubr.f32.gmra.mrb[0].mxu0 %v1517
      %v1519 = vpop.f32.mrb[0].mxu0
      %v1520 = vadd.f32 %v1412, %v1519
      %v1521 = vpop.f32.mrb[0].mxu0
      %v1522 = vadd.f32 %v1414, %v1521
      %1523 = vmatprep.mubr.f32.mxu0 0.0
      %v1524 = vand.u32 %v1059, 4294901760
      %v1525 = vsub.f32 %v1059, %v1524
      %v1526 = vand.u32 %v1525, 4294901760
      %1527 = vmatmul.mubr.f32.gmra.mrb[0].mxu0 %v1526
      %v1528 = vpop.f32.mrb[0].mxu0
      %v1529 = vadd.f32 %v1420, %v1528
      %v1530 = vpop.f32.mrb[0].mxu0
      %v1531 = vadd.f32 %v1422, %v1530
      %1532 = vdwg.mxu0
      %v1533 = vand.u32 %v1013, 4294901760
      %v1534 = vsub.f32 %v1013, %v1533
      %v1535 = vand.u32 %v1534, 4294901760
      %1536 = vmatprep.subr.mxu0 %v1535
      %v1537 = vand.u32 %v1012, 4294901760
      %v1538 = vsub.f32 %v1012, %v1537
      %v1539 = vand.u32 %v1538, 4294901760
      %1540 = vmatpush1.msra.mxu0 %v1539
      %v1541 = vand.u32 %v1015, 4294901760
      %v1542 = vsub.f32 %v1015, %v1541
      %v1543 = vand.u32 %v1542, 4294901760
      %1544 = vmatprep.subr.mxu0 %v1543
      %v1545 = vand.u32 %v1014, 4294901760
      %v1546 = vsub.f32 %v1014, %v1545
      %v1547 = vand.u32 %v1546, 4294901760
      %1548 = vmatpush1.msra.mxu0 %v1547
      %v1549 = vand.u32 %v1017, 4294901760
      %v1550 = vsub.f32 %v1017, %v1549
      %v1551 = vand.u32 %v1550, 4294901760
      %1552 = vmatprep.subr.mxu0 %v1551
      %v1553 = vand.u32 %v1016, 4294901760
      %v1554 = vsub.f32 %v1016, %v1553
      %v1555 = vand.u32 %v1554, 4294901760
      %1556 = vmatpush1.msra.mxu0 %v1555
      %v1557 = vand.u32 %v1019, 4294901760
      %v1558 = vsub.f32 %v1019, %v1557
      %v1559 = vand.u32 %v1558, 4294901760
      %1560 = vmatprep.subr.mxu0 %v1559
      %v1561 = vand.u32 %v1018, 4294901760
      %v1562 = vsub.f32 %v1018, %v1561
      %v1563 = vand.u32 %v1562, 4294901760
      %1564 = vmatpush1.msra.mxu0 %v1563
      %1565 = vmatprep.subr.mxu0 0.0
      %1566 = vmatpush1.msra.mxu0 0.0
      %1567 = vmatprep.subr.mxu0 0.0
      %1568 = vmatpush1.msra.mxu0 0.0
      %1569 = vmatprep.subr.mxu0 0.0
      %1570 = vmatpush1.msra.mxu0 0.0
      %1571 = vmatprep.subr.mxu0 0.0
      %1572 = vmatpush1.msra.mxu0 0.0
      %1573 = vmatprep.subr.mxu0 0.0
      %1574 = vmatpush1.msra.mxu0 0.0
      %1575 = vmatprep.subr.mxu0 0.0
      %1576 = vmatpush1.msra.mxu0 0.0
      %1577 = vmatprep.subr.mxu0 0.0
      %1578 = vmatpush1.msra.mxu0 0.0
      %1579 = vmatprep.subr.mxu0 0.0
      %1580 = vmatpush1.msra.mxu0 0.0
      %1581 = vmatprep.subr.mxu0 0.0
      %1582 = vmatpush1.msra.mxu0 0.0
      %1583 = vmatprep.subr.mxu0 0.0
      %1584 = vmatpush1.msra.mxu0 0.0
      %1585 = vmatprep.subr.mxu0 0.0
      %1586 = vmatpush1.msra.mxu0 0.0
      %1587 = vmatprep.subr.mxu0 0.0
      %1588 = vmatpush1.msra.mxu0 0.0
      %1589 = vmatprep.subr.mxu0 0.0
      %1590 = vmatpush1.msra.mxu0 0.0
      %1591 = vmatprep.subr.mxu0 0.0
      %1592 = vmatpush1.msra.mxu0 0.0
      %1593 = vmatprep.subr.mxu0 0.0
      %1594 = vmatpush1.msra.mxu0 0.0
      %1595 = vmatprep.subr.mxu0 0.0
      %1596 = vmatpush1.msra.mxu0 0.0
      %1597 = vmatprep.subr.mxu0 0.0
      %1598 = vmatpush1.msra.mxu0 0.0
      %1599 = vmatprep.subr.mxu0 0.0
      %1600 = vmatpush1.msra.mxu0 0.0
      %1601 = vmatprep.subr.mxu0 0.0
      %1602 = vmatpush1.msra.mxu0 0.0
      %1603 = vmatprep.subr.mxu0 0.0
      %1604 = vmatpush1.msra.mxu0 0.0
      %1605 = vmatprep.subr.mxu0 0.0
      %1606 = vmatpush1.msra.mxu0 0.0
      %1607 = vmatprep.subr.mxu0 0.0
      %1608 = vmatpush1.msra.mxu0 0.0
      %1609 = vmatprep.subr.mxu0 0.0
      %1610 = vmatpush1.msra.mxu0 0.0
      %1611 = vmatprep.subr.mxu0 0.0
      %1612 = vmatpush1.msra.mxu0 0.0
      %1613 = vmatprep.subr.mxu0 0.0
      %1614 = vmatpush1.msra.mxu0 0.0
      %1615 = vmatprep.subr.mxu0 0.0
      %1616 = vmatpush1.msra.mxu0 0.0
      %1617 = vmatprep.subr.mxu0 0.0
      %1618 = vmatpush1.msra.mxu0 0.0
      %1619 = vmatprep.subr.mxu0 0.0
      %1620 = vmatpush1.msra.mxu0 0.0
      %1621 = vmatprep.mubr.f32.mxu0 0.0
      %v1622 = vand.u32 %v1050, 4294901760
      %1623 = vmatmul.mubr.f32.gmra.mrb[0].mxu0 %v1622
      %v1624 = vpop.f32.mrb[0].mxu0
      %v1625 = vadd.f32 %v1502, %v1624
      %v1626 = vpop.f32.mrb[0].mxu0
      %v1627 = vadd.f32 %v1504, %v1626
      %1628 = vmatprep.mubr.f32.mxu0 0.0
      %v1629 = vand.u32 %v1053, 4294901760
      %1630 = vmatmul.mubr.f32.gmra.mrb[0].mxu0 %v1629
      %v1631 = vpop.f32.mrb[0].mxu0
      %v1632 = vadd.f32 %v1511, %v1631
      %v1633 = vpop.f32.mrb[0].mxu0
      %v1634 = vadd.f32 %v1513, %v1633
      %1635 = vmatprep.mubr.f32.mxu0 0.0
      %v1636 = vand.u32 %v1056, 4294901760
      %1637 = vmatmul.mubr.f32.gmra.mrb[0].mxu0 %v1636
      %v1638 = vpop.f32.mrb[0].mxu0
      %v1639 = vadd.f32 %v1520, %v1638
      %v1640 = vpop.f32.mrb[0].mxu0
      %v1641 = vadd.f32 %v1522, %v1640
      %1642 = vmatprep.mubr.f32.mxu0 0.0
      %v1643 = vand.u32 %v1059, 4294901760
      %1644 = vmatmul.mubr.f32.gmra.mrb[0].mxu0 %v1643
      %v1645 = vpop.f32.mrb[0].mxu0
      %v1646 = vadd.f32 %v1529, %v1645
      %v1647 = vpop.f32.mrb[0].mxu0
      %v1648 = vadd.f32 %v1531, %v1647
      %1649 = vdwg.mxu0
      %v1650 = vand.u32 %v1013, 4294901760
      %1651 = vmatprep.subr.mxu0 %v1650
      %v1652 = vand.u32 %v1012, 4294901760
      %1653 = vmatpush1.msra.mxu0 %v1652
      %v1654 = vand.u32 %v1015, 4294901760
      %1655 = vmatprep.subr.mxu0 %v1654
      %v1656 = vand.u32 %v1014, 4294901760
      %1657 = vmatpush1.msra.mxu0 %v1656
      %v1658 = vand.u32 %v1017, 4294901760
      %1659 = vmatprep.subr.mxu0 %v1658
      %v1660 = vand.u32 %v1016, 4294901760
      %1661 = vmatpush1.msra.mxu0 %v1660
      %v1662 = vand.u32 %v1019, 4294901760
      %1663 = vmatprep.subr.mxu0 %v1662
      %v1664 = vand.u32 %v1018, 4294901760
      %1665 = vmatpush1.msra.mxu0 %v1664
      %1666 = vmatprep.subr.mxu0 0.0
      %1667 = vmatpush1.msra.mxu0 0.0
      %1668 = vmatprep.subr.mxu0 0.0
      %1669 = vmatpush1.msra.mxu0 0.0
      %1670 = vmatprep.subr.mxu0 0.0
      %1671 = vmatpush1.msra.mxu0 0.0
      %1672 = vmatprep.subr.mxu0 0.0
      %1673 = vmatpush1.msra.mxu0 0.0
      %1674 = vmatprep.subr.mxu0 0.0
      %1675 = vmatpush1.msra.mxu0 0.0
      %1676 = vmatprep.subr.mxu0 0.0
      %1677 = vmatpush1.msra.mxu0 0.0
      %1678 = vmatprep.subr.mxu0 0.0
      %1679 = vmatpush1.msra.mxu0 0.0
      %1680 = vmatprep.subr.mxu0 0.0
      %1681 = vmatpush1.msra.mxu0 0.0
      %1682 = vmatprep.subr.mxu0 0.0
      %1683 = vmatpush1.msra.mxu0 0.0
      %1684 = vmatprep.subr.mxu0 0.0
      %1685 = vmatpush1.msra.mxu0 0.0
      %1686 = vmatprep.subr.mxu0 0.0
      %1687 = vmatpush1.msra.mxu0 0.0
      %1688 = vmatprep.subr.mxu0 0.0
      %1689 = vmatpush1.msra.mxu0 0.0
      %1690 = vmatprep.subr.mxu0 0.0
      %1691 = vmatpush1.msra.mxu0 0.0
      %1692 = vmatprep.subr.mxu0 0.0
      %1693 = vmatpush1.msra.mxu0 0.0
      %1694 = vmatprep.subr.mxu0 0.0
      %1695 = vmatpush1.msra.mxu0 0.0
      %1696 = vmatprep.subr.mxu0 0.0
      %1697 = vmatpush1.msra.mxu0 0.0
      %1698 = vmatprep.subr.mxu0 0.0
      %1699 = vmatpush1.msra.mxu0 0.0
      %1700 = vmatprep.subr.mxu0 0.0
      %1701 = vmatpush1.msra.mxu0 0.0
      %1702 = vmatprep.subr.mxu0 0.0
      %1703 = vmatpush1.msra.mxu0 0.0
      %1704 = vmatprep.subr.mxu0 0.0
      %1705 = vmatpush1.msra.mxu0 0.0
      %1706 = vmatprep.subr.mxu0 0.0
      %1707 = vmatpush1.msra.mxu0 0.0
      %1708 = vmatprep.subr.mxu0 0.0
      %1709 = vmatpush1.msra.mxu0 0.0
      %1710 = vmatprep.subr.mxu0 0.0
      %1711 = vmatpush1.msra.mxu0 0.0
      %1712 = vmatprep.subr.mxu0 0.0
      %1713 = vmatpush1.msra.mxu0 0.0
      %1714 = vmatprep.subr.mxu0 0.0
      %1715 = vmatpush1.msra.mxu0 0.0
      %1716 = vmatprep.subr.mxu0 0.0
      %1717 = vmatpush1.msra.mxu0 0.0
      %1718 = vmatprep.subr.mxu0 0.0
      %1719 = vmatpush1.msra.mxu0 0.0
      %1720 = vmatprep.subr.mxu0 0.0
      %1721 = vmatpush1.msra.mxu0 0.0
      %1722 = vmatprep.mubr.f32.mxu0 0.0
      %v1723 = vand.u32 %v1050, 4294901760
      %1724 = vmatmul.mubr.f32.gmra.mrb[0].mxu0 %v1723
      %v1725 = vpop.f32.mrb[0].mxu0
      %v1726 = vadd.f32 %v1625, %v1725
      %v1727 = vpop.f32.mrb[0].mxu0
      %v1728 = vadd.f32 %v1627, %v1727
      %1729 = vmatprep.mubr.f32.mxu0 0.0
      %v1730 = vand.u32 %v1053, 4294901760
      %1731 = vmatmul.mubr.f32.gmra.mrb[0].mxu0 %v1730
      %v1732 = vpop.f32.mrb[0].mxu0
      %v1733 = vadd.f32 %v1632, %v1732
      %v1734 = vpop.f32.mrb[0].mxu0
      %v1735 = vadd.f32 %v1634, %v1734
      %1736 = vmatprep.mubr.f32.mxu0 0.0
      %v1737 = vand.u32 %v1056, 4294901760
      %1738 = vmatmul.mubr.f32.gmra.mrb[0].mxu0 %v1737
      %v1739 = vpop.f32.mrb[0].mxu0
      %v1740 = vadd.f32 %v1639, %v1739
      %v1741 = vpop.f32.mrb[0].mxu0
      %v1742 = vadd.f32 %v1641, %v1741
      %1743 = vmatprep.mubr.f32.mxu0 0.0
      %v1744 = vand.u32 %v1059, 4294901760
      %1745 = vmatmul.mubr.f32.gmra.mrb[0].mxu0 %v1744
      %v1746 = vpop.f32.mrb[0].mxu0
      %v1747 = vadd.f32 %v1646, %v1746
      %v1748 = vpop.f32.mrb[0].mxu0
      %v1749 = vadd.f32 %v1648, %v1748
      %1750 = vdwg.mxu0
      %v1751 = vmul.f32 %v1726, 0.2
      %v1752 = vmul.f32 %v1728, 0.2
      %v1753 = vmul.f32 %v1733, 0.2
      %v1754 = vmul.f32 %v1735, 0.2
      %v1755 = vmul.f32 %v1740, 0.2
      %v1756 = vmul.f32 %v1742, 0.2
      %v1757 = vmul.f32 %v1747, 0.2
      %v1758 = vmul.f32 %v1749, 0.2
      %v1759 = vmax.f32 %v1726, %v1751
      %v1760 = vmax.f32 %v1728, %v1752
      %v1761 = vmax.f32 %v1733, %v1753
      %v1762 = vmax.f32 %v1735, %v1754
      %v1763 = vmax.f32 %v1740, %v1755
      %v1764 = vmax.f32 %v1742, %v1756
      %v1765 = vmax.f32 %v1747, %v1757
      %v1766 = vmax.f32 %v1749, %v1758
      %v1767 = vld [vmem:[%s6] sm:$0xff]
      %v1768 = vld [vmem:[%s6 + $0x8] sm:$0xff]
      %v1769 = vld [vmem:[%s6 + $0x10] sm:$0xff]
      %v1770 = vld [vmem:[%s6 + $0x18] sm:$0xff]
      %1772 = vset.pattern.permute.xlu0 0
      %1773 = vperm.xlu0 %1772, %v1767
      %v1774 = vpop.permute.xlu0 %1773
      %1777 = vset.pattern.permute.xlu0 0
      %1778 = vperm.xlu0 %1777, %v1768
      %v1779 = vpop.permute.xlu0 %1778
      %1782 = vset.pattern.permute.xlu0 0
      %1783 = vperm.xlu0 %1782, %v1769
      %v1784 = vpop.permute.xlu0 %1783
      %1787 = vset.pattern.permute.xlu0 0
      %1788 = vperm.xlu0 %1787, %v1770
      %v1789 = vpop.permute.xlu0 %1788
      %v1791 = vmul.f32 %v1759, %v1774
      %v1792 = vmul.f32 %v1760, %v1774
      %v1793 = vmul.f32 %v1761, %v1779
      %v1794 = vmul.f32 %v1762, %v1779
      %v1795 = vmul.f32 %v1763, %v1784
      %v1796 = vmul.f32 %v1764, %v1784
      %v1797 = vmul.f32 %v1765, %v1789
      %v1798 = vmul.f32 %v1766, %v1789
      %v1799 = vadd.f32 %v1791, %v1793
      %v1800 = vadd.f32 %v1799, %v1795
      %v1801 = vadd.f32 %v1800, %v1797
      %v1802 = vrot.slane %v1801, 4
      %v1803 = vadd.f32 %v1801, %v1802
      %v1804 = vrot.slane %v1803, 2
      %v1805 = vadd.f32 %v1803, %v1804
      %v1806 = vrot.slane %v1805, 1
      %v1807 = vadd.f32 %v1805, %v1806
      %v1808 = vadd.f32 %v1792, %v1794
      %v1809 = vadd.f32 %v1808, %v1796
      %v1810 = vadd.f32 %v1809, %v1798
      %v1811 = vrot.slane %v1810, 4
      %v1812 = vadd.f32 %v1810, %v1811
      %v1813 = vrot.slane %v1812, 2
      %v1814 = vadd.f32 %v1812, %v1813
      %v1815 = vrot.slane %v1814, 1
      %v1816 = vadd.f32 %v1814, %v1815
      %s1817 = sld [smem:[#allocation3]]
      %v1818 = vstv %s1817
      %v1819 = vadd.f32 %v1807, %v1818
      %v1820 = vadd.f32 %v1816, %v1818
      %v1821 = vxor.u32 %v1819, 2147483648
      %v1822 = vxor.u32 %v1820, 2147483648
      %v1823 = vmul.f32 %v1821, 1.442695
      %v1824 = vpow.pop %v1823
      %v1825 = vmul.f32 %v1822, 1.442695
      %v1826 = vpow.pop %v1825
      %v1827 = vadd.f32 %v1824, 1.0
      %v1828 = vadd.f32 %v1826, 1.0
      %v1829 = vrcp.pop %v1827
      %v1830 = vmul.f32 1.0, %v1829
      %v1831 = vrcp.pop %v1828
      %v1832 = vmul.f32 1.0, %v1831
      %v1835 = vcombine.low %v1830, %v1832
      %v1837 = vunpack.c.l.s4 1966171168
      %v1838 = vunpack.c.0.s8 %v1837
      %v1839 = vlaneseq
      %v1840 = vshrl.u32 %v1839, 7
      %v1841 = vsub.s32 %v1838, %v1840
      %v1842 = vrot.slane %v1835, %v1841
      %v1844 = vunpack.c.l.s4 1966171168
      %v1845 = vunpack.c.0.s8 %v1844
      %v1846 = vlaneseq
      %v1847 = vshrl.u32 %v1846, 7
      %v1848 = vsub.s32 %v1845, %v1847
      %v1849 = vrot.slane %v1842, %v1848
      %1851 = vst.msk [vmem:[%s322] sm:$0x3] %vm329, %v1849
      %s1852 = smul.u32 2, %s20
      %p1853 = scmp.lt.s32.totalorder %s1852, 3
      %s1854 = scalar_select %p1853, %s1852, 3
      %s1855 = scalar_lea.vmem %s8, %s1854
      // Predicated region
      $region53: #{dist2logit.1} parent=51 // pred_check
        %p1856 = pneg %p216
      $region54: #{dist2logit.1} parent=51 // pred_check_branch
        %1858 = sbr.rel (%p1856) target = $region56
      $region55: #{dist2logit.1} parent=51 // pred_region
        %s1859 = smul.u32 2, %s20
      $region56: #{dist2logit.1} parent=51 // pred_fallthru
        _
    $region52: #{dist2logit.1} parent=5 // pred_fallthru
      _
    %p1860 = scmp.le.s32.totalorder 2, %s15
    // Predicated region
    $region57: #{dist2logit.1} parent=5 // pred_check
      %p1861 = pneg %p1860
    $region58: #{dist2logit.1} parent=5 // pred_check_branch
      %1863 = sbr.rel (%p1861) target = $region60
    $region59: #{dist2logit.1} parent=5 // pred_region
      %s1864 = ssub.s32 %s15, 2
      // Predicated region
      $region61: #{dist2logit.1} parent=59 // pred_check
        %p1865 = pneg %p222
      $region62: #{dist2logit.1} parent=59 // pred_check_branch
        %1867 = sbr.rel (%p1865) target = $region64
      $region63: #{dist2logit.1} parent=59 // pred_region
        %s1868 = smul.u32 2, %s21
        %p1869 = scmp.lt.s32.totalorder %s1868, 3
        %s1870 = scalar_select %p1869, %s1868, 3
        %s1871 = scalar_lea.vmem %s8, %s1870
      $region64: #{dist2logit.1} parent=59 // pred_fallthru
        _
    $region60: #{dist2logit.1} parent=5 // pred_fallthru
      _
  $region6: #{dist2logit.1} parent=0 // loop_footer
    %s19 = sadd.s32 1, %s15
  $region7: #{dist2logit.1} parent=0 // loop_footer_branch
    %14 = sbr.rel target = $region3
  $region8: #{dist2logit.1} parent=0 // loop_exit
    _

</llo_original>
